<compile_context>
chip_gen: v7x
topology: tpu7x:2x2x1
jax: 0.10.0
libtpu: 0.0.40
codegen_flags: <defaults>
</compile_context>

<pallas_src>
import functools

import jax
import jax.numpy as jnp
from jax.experimental import pallas as pl
from jax.experimental.pallas import tpu as pltpu


def _round_up(x, m):
    return ((x + m - 1) // m) * m


# ----------------------------------------------------------------------------
# Pallas GEMM:  out(Cout, M) = W(Cout, K) @ A^T(K, M) + bias, optional ReLU
# ----------------------------------------------------------------------------
def _matmul_bias_kernel(w_ref, a_ref, b_ref, o_ref, *, relu):
    acc = jnp.dot(w_ref[...], a_ref[...], preferred_element_type=jnp.float32)
    acc = acc + b_ref[...]                     # (Cout,1) broadcast along lanes
    if relu:
        acc = jnp.maximum(acc, 0.0)
    o_ref[...] = acc.astype(o_ref.dtype)


def matmul_bias_t(w, a_t, bias, *, relu=False, tm=512):
    """w: (Cout,K) f32, a_t: (K,M) f32, bias: (Cout,) -> (Cout,M) f32.

    Lane-dense output (M on lanes), M tiled over a parallel grid, bf16 MXU
    inputs with f32 accumulation.  Weights/bias stay VMEM-resident across tiles.
    """
    Cout, K = w.shape
    K2, M = a_t.shape
    assert K == K2

    cout_p = _round_up(Cout, 8)                       # sublane-align the small dim
    m_tile = min(tm, _round_up(M, 128))               # lane-dense tile
    m_p = _round_up(M, m_tile)

    w_p = jnp.pad(w.astype(jnp.bfloat16), ((0, cout_p - Cout), (0, 0)))
    b_p = jnp.pad(bias.reshape(Cout, 1).astype(jnp.float32),
                  ((0, cout_p - Cout), (0, 0)))
    a_p = jnp.pad(a_t.astype(jnp.bfloat16), ((0, 0), (0, m_p - M)))

    out = pl.pallas_call(
        functools.partial(_matmul_bias_kernel, relu=relu),
        grid=(m_p // m_tile,),
        in_specs=[
            pl.BlockSpec((cout_p, K), lambda i: (0, 0)),     # weights resident
            pl.BlockSpec((K, m_tile), lambda i: (0, i)),     # pipelined M tiles
            pl.BlockSpec((cout_p, 1), lambda i: (0, 0)),     # bias resident
        ],
        out_specs=pl.BlockSpec((cout_p, m_tile), lambda i: (0, i)),
        out_shape=jax.ShapeDtypeStruct((cout_p, m_p), jnp.float32),
        compiler_params=pltpu.CompilerParams(
            dimension_semantics=("parallel",)),              # megacore-shardable
    )(w_p, a_p, b_p)
    return out[:Cout, :M]


# ----------------------------------------------------------------------------
# Rate kernel: sum of -log2(CDF(q+0.5) - CDF(q-0.5)), channel-on-sublane layout
# ----------------------------------------------------------------------------
def _rate_kernel(q_ref, a_ref, b_ref, o_ref):
    q = q_ref[...]                              # (Cl, M)   spatial on lanes
    a = a_ref[...]                              # (Cl, 1)
    b = b_ref[...]                              # (Cl, 1)
    upper = jax.nn.sigmoid(a * (q + 0.5) + b)
    lower = jax.nn.sigmoid(a * (q - 0.5) + b)
    p = jnp.maximum(upper - lower, 1e-9)        # clamp: avoid -log2(0) -> inf
    o_ref[...] = jnp.sum(-jnp.log2(p)).reshape(1, 1)


def rate_bits_sum(q_cm, a, b):
    """q_cm: (Cl, N*H*W) latent, a/b: (Cl, 1) CDF params -> (1,1) sum of bits."""
    Cl, M = q_cm.shape
    return pl.pallas_call(
        _rate_kernel,
        grid=(1,),
        in_specs=[
            pl.BlockSpec((Cl, M), lambda i: (0, 0)),
            pl.BlockSpec((Cl, 1), lambda i: (0, 0)),
            pl.BlockSpec((Cl, 1), lambda i: (0, 0)),
        ],
        out_specs=pl.BlockSpec((1, 1), lambda i: (0, 0)),
        out_shape=jax.ShapeDtypeStruct((1, 1), jnp.float32),
    )(q_cm, a, b)


# ----------------------------------------------------------------------------
# MSE kernel: lane-dense (rows,128) slab, grid-tiled with resident accumulator
# ----------------------------------------------------------------------------
def _mse_kernel(x_ref, y_ref, o_ref, *, inv_count):
    @pl.when(pl.program_id(0) == 0)
    def _():
        o_ref[...] = jnp.zeros_like(o_ref)
    d = x_ref[...] - y_ref[...]
    o_ref[...] += (jnp.sum(d * d) * inv_count).reshape(1, 1)


def mse_mean(x, y, *, lane=128, row_tile=256):
    total = x.size
    rows = pl.cdiv(total, lane)
    rt = min(row_tile, _round_up(rows, 8))
    rows_p = _round_up(rows, rt)
    pad = rows_p * lane - total
    # zero padding on BOTH inputs contributes 0 to the squared-diff sum
    x2 = jnp.pad(x.reshape(-1), (0, pad)).reshape(rows_p, lane)
    y2 = jnp.pad(y.reshape(-1), (0, pad)).reshape(rows_p, lane)
    out = pl.pallas_call(
        functools.partial(_mse_kernel, inv_count=1.0 / total),
        grid=(rows_p // rt,),
        in_specs=[
            pl.BlockSpec((rt, lane), lambda i: (i, 0)),
            pl.BlockSpec((rt, lane), lambda i: (i, 0)),
        ],
        out_specs=pl.BlockSpec((1, 1), lambda i: (0, 0)),   # resident accumulator
        out_shape=jax.ShapeDtypeStruct((1, 1), jnp.float32),
        compiler_params=pltpu.CompilerParams(
            dimension_semantics=("arbitrary",)),
    )(x2, y2)
    return out[0, 0]


# ----------------------------------------------------------------------------
# Conv helpers (im2col glue in XLA, GEMM in Pallas)
# ----------------------------------------------------------------------------
def _im2col_t(x, kh, kw, stride, padding):
    """x: (N,C,H,W) -> (C*kh*kw, N*Ho*Wo) patch matrix (features x positions)."""
    N, C, H, W = x.shape
    xp = jnp.pad(x, ((0, 0), (0, 0), (padding, padding), (padding, padding)))
    Ho = (H + 2 * padding - kh) // stride + 1
    Wo = (W + 2 * padding - kw) // stride + 1
    cols = []
    for i in range(kh):
        for j in range(kw):
            cols.append(xp[:, :, i:i + stride * Ho:stride, j:j + stride * Wo:stride])
    # (kh*kw, N, C, Ho, Wo) -> (C, kh*kw, N, Ho, Wo) -> (C*kh*kw, N*Ho*Wo)
    # feature ordering (c-major, then i, j) matches w.reshape(Cout, C*kh*kw)
    cols = jnp.stack(cols, axis=0)
    feat = cols.transpose(2, 0, 1, 3, 4).reshape(C * kh * kw, N * Ho * Wo)
    return feat, Ho, Wo
# TODO(synk): im2col + zero-interleave stay as XLA glue; in-kernel halo-tiled
# patch extraction / sub-pixel (stride^2) ConvTranspose decomposition not done.


def conv2d(x, w, b, *, stride, padding, relu=False):
    """x: (N,Cin,H,W), w: (Cout,Cin,kh,kw) -> (N,Cout,Ho,Wo)."""
    N, C, H, W = x.shape
    Cout, Cin, kh, kw = w.shape
    assert C == Cin
    a_t, Ho, Wo = _im2col_t(x, kh, kw, stride, padding)
    wm = w.reshape(Cout, Cin * kh * kw)
    out = matmul_bias_t(wm, a_t, b, relu=relu)          # (Cout, N*Ho*Wo)
    return out.reshape(Cout, N, Ho, Wo).transpose(1, 0, 2, 3)


def conv_transpose2d(x, w, b, *, stride, padding, output_padding, relu=False):
    """x: (N,Cin,H,W), w: (Cin,Cout,kh,kw) (PyTorch ConvTranspose2d layout)."""
    N, Cin, H, W = x.shape
    Cin_w, Cout, kh, kw = w.shape
    assert Cin == Cin_w
    # zero-interleave (input dilation by stride)
    Hd = (H - 1) * stride + 1
    Wd = (W - 1) * stride + 1
    xd = jnp.zeros((N, Cin, Hd, Wd), x.dtype).at[:, :, ::stride, ::stride].set(x)
    pt = kh - 1 - padding
    pb = kh - 1 - padding + output_padding
    xp = jnp.pad(xd, ((0, 0), (0, 0), (pt, pb), (pt, pb)))
    # flip kernel spatially, swap in/out channels -> ordinary conv
    wf = jnp.flip(w, axis=(2, 3)).transpose(1, 0, 2, 3)   # (Cout, Cin, kh, kw)
    return conv2d(xp, wf, b, stride=1, padding=0, relu=relu)


# ----------------------------------------------------------------------------
# Net (Analysis -> quantize -> rate -> Synthesis -> distortion)
# ----------------------------------------------------------------------------
C_IN, C_MID, C_LAT = 3, 16, 8
K = 5


def init_params(key):
    ks = jax.random.split(key, 4)

    def w_init(k, shape, fan_in):
        return jax.random.normal(k, shape, jnp.float32) * (1.0 / jnp.sqrt(fan_in))

    return {
        # Analysis
        "ana1_w": w_init(ks[0], (C_MID, C_IN, K, K), C_IN * K * K),
        "ana1_b": jnp.zeros((C_MID,), jnp.float32),
        "ana2_w": w_init(ks[1], (C_LAT, C_MID, K, K), C_MID * K * K),
        "ana2_b": jnp.zeros((C_LAT,), jnp.float32),
        # Synthesis (ConvTranspose2d weight layout: (Cin, Cout, kh, kw))
        "syn1_w": w_init(ks[2], (C_LAT, C_MID, K, K), C_LAT * K * K),
        "syn1_b": jnp.zeros((C_MID,), jnp.float32),
        "syn2_w": w_init(ks[3], (C_MID, C_IN, K, K), C_MID * K * K),
        "syn2_b": jnp.zeros((C_IN,), jnp.float32),
        # Cumulator (per-latent-channel logistic CDF)
        "cum_a": jnp.zeros((C_LAT,), jnp.float32),   # slope = softplus(cum_a)
        "cum_b": jnp.zeros((C_LAT,), jnp.float32),
    }


def net_forward(params, X, *, is_train=False, noise_key=None):
    # ---- Analysis transform ----
    # TODO(synk): the two analysis (and synthesis) convs could be fused into one
    # pallas_call with the intermediate kept in VMEM scratch; kept separate here.
    h = conv2d(X, params["ana1_w"], params["ana1_b"], stride=2, padding=2, relu=True)
    y = conv2d(h, params["ana2_w"], params["ana2_b"], stride=2, padding=2, relu=False)

    # ---- Quantization ----
    if is_train:
        noise = jax.random.uniform(noise_key, y.shape, jnp.float32, -0.5, 0.5)
        q = y + noise
    else:
        q = jnp.round(y)

    # ---- Rate (channel-on-sublane, spatial-on-lane layout) ----
    Nb, Cl, Hq, Wq = q.shape
    q_cm = q.transpose(1, 0, 2, 3).reshape(Cl, Nb * Hq * Wq)
    a = jax.nn.softplus(params["cum_a"]).reshape(Cl, 1)
    bb = params["cum_b"].reshape(Cl, 1)
    bits = rate_bits_sum(q_cm, a, bb)
    rate = bits[0, 0] / (X.shape[0] * X.shape[2] * X.shape[3])

    # ---- Synthesis transform ----
    h2 = conv_transpose2d(q, params["syn1_w"], params["syn1_b"],
                          stride=2, padding=2, output_padding=1, relu=True)
    X_hat = conv_transpose2d(h2, params["syn2_w"], params["syn2_b"],
                             stride=2, padding=2, output_padding=1, relu=False)

    # ---- Distortion ----
    distortion = mse_mean(X, X_hat)

    return X_hat, rate, distortion


if __name__ == "__main__":
    key = jax.random.PRNGKey(0)
    pkey, xkey = jax.random.split(key)
    params = init_params(pkey)
    X = jax.random.normal(xkey, (2, C_IN, 16, 16), jnp.float32)

    fwd = jax.jit(functools.partial(net_forward, is_train=False))
    X_hat, rate, distortion = fwd(params, X)
    jax.block_until_ready((X_hat, rate, distortion))

    assert X_hat.shape == X.shape
    assert rate.shape == () and distortion.shape == ()
    assert bool(jnp.isfinite(rate)) and bool(jnp.isfinite(distortion))
    print("KERNEL_OK")
</pallas_src>

<mosaic_0001>
module attributes {stable_mosaic.version = 11 : i64} {
  func.func @_matmul_bias_kernel(%arg0: i32, %arg1: memref<16x75xbf16, #tpu.memory_space<vmem>>, %arg2: memref<75x128xbf16, #tpu.memory_space<vmem>>, %arg3: memref<16x1xf32, #tpu.memory_space<vmem>>, %arg4: memref<16x128xf32, #tpu.memory_space<vmem>>) attributes {dimension_semantics = [#tpu.dimension_semantics<parallel>], iteration_bounds = array<i64: 1>, scalar_prefetch = 0 : i64, scratch_operands = 0 : i64, tpu.core_type = #tpu.core_type<tc>, window_params = [{pipeline_mode = #tpu.pipeline_mode<synchronous>, transform_indices = @transform_0, window_bounds = array<i64: 16, 75>}, {transform_indices = @transform_1, window_bounds = array<i64: 75, 128>}, {pipeline_mode = #tpu.pipeline_mode<synchronous>, transform_indices = @transform_2, window_bounds = array<i64: 16, 1>}, {transform_indices = @transform_3, window_bounds = array<i64: 16, 128>}]} {
    %c0 = arith.constant 0 : index
    %c0_0 = arith.constant 0 : index
    %0 = vector.load %arg1[%c0, %c0_0] : memref<16x75xbf16, #tpu.memory_space<vmem>>, vector<16x75xbf16>
    %c0_1 = arith.constant 0 : index
    %c0_2 = arith.constant 0 : index
    %1 = vector.load %arg2[%c0_1, %c0_2] : memref<75x128xbf16, #tpu.memory_space<vmem>>, vector<75x128xbf16>
    %cst = arith.constant dense<0.000000e+00> : vector<16x128xf32>
    %2 = tpu.matmul %0, %1, %cst {dimension_numbers = #tpu.dot_dimension_numbers<[1], [0], [0], [1], [0, 0, 1, 1], [], []>} : vector<16x75xbf16>, vector<75x128xbf16>, vector<16x128xf32> -> vector<16x128xf32>
    %c0_3 = arith.constant 0 : index
    %c0_4 = arith.constant 0 : index
    %3 = vector.load %arg3[%c0_3, %c0_4] : memref<16x1xf32, #tpu.memory_space<vmem>>, vector<16x1xf32>
    %4 = vector.broadcast %3 : vector<16x1xf32> to vector<16x128xf32>
    %5 = arith.addf %2, %4 : vector<16x128xf32>
    %cst_5 = arith.constant 0.000000e+00 : f32
    %6 = vector.broadcast %cst_5 : f32 to vector<16x128xf32>
    %7 = arith.maximumf %5, %6 : vector<16x128xf32>
    %c0_6 = arith.constant 0 : index
    %c0_7 = arith.constant 0 : index
    %8 = vector.load %arg4[%c0_6, %c0_7] : memref<16x128xf32, #tpu.memory_space<vmem>>, vector<16x128xf32>
    tpu.vector_store %arg4[%c0_6, %c0_7], %7 {strides = array<i32>} : memref<16x128xf32, #tpu.memory_space<vmem>>, vector<16x128xf32>,
    return
  }
  func.func @transform_0(%arg0: i32) -> (i32, i32) {
    %c0_i32 = arith.constant 0 : i32
    %c0_i32_0 = arith.constant 0 : i32
    %c0_i32_1 = arith.constant 0 : i32
    return %c0_i32, %c0_i32_0 : i32, i32
  }
  func.func @transform_1(%arg0: i32) -> (i32, i32) {
    %c0_i32 = arith.constant 0 : i32
    %c0_i32_0 = arith.constant 0 : i32
    return %c0_i32, %arg0 : i32, i32
  }
  func.func @transform_2(%arg0: i32) -> (i32, i32) {
    %c0_i32 = arith.constant 0 : i32
    %c0_i32_0 = arith.constant 0 : i32
    %c0_i32_1 = arith.constant 0 : i32
    return %c0_i32, %c0_i32_0 : i32, i32
  }
  func.func @transform_3(%arg0: i32) -> (i32, i32) {
    %c0_i32 = arith.constant 0 : i32
    %c0_i32_0 = arith.constant 0 : i32
    return %c0_i32, %arg0 : i32, i32
  }
}

module attributes {stable_mosaic.version = 11 : i64} {
  func.func @_matmul_bias_kernel(%arg0: i32, %arg1: memref<8x400xbf16, #tpu.memory_space<vmem>>, %arg2: memref<400x128xbf16, #tpu.memory_space<vmem>>, %arg3: memref<8x1xf32, #tpu.memory_space<vmem>>, %arg4: memref<8x128xf32, #tpu.memory_space<vmem>>) attributes {dimension_semantics = [#tpu.dimension_semantics<parallel>], iteration_bounds = array<i64: 1>, scalar_prefetch = 0 : i64, scratch_operands = 0 : i64, tpu.core_type = #tpu.core_type<tc>, window_params = [{pipeline_mode = #tpu.pipeline_mode<synchronous>, transform_indices = @transform_0, window_bounds = array<i64: 8, 400>}, {transform_indices = @transform_1, window_bounds = array<i64: 400, 128>}, {pipeline_mode = #tpu.pipeline_mode<synchronous>, transform_indices = @transform_2, window_bounds = array<i64: 8, 1>}, {transform_indices = @transform_3, window_bounds = array<i64: 8, 128>}]} {
    %c0 = arith.constant 0 : index
    %c0_0 = arith.constant 0 : index
    %0 = vector.load %arg1[%c0, %c0_0] : memref<8x400xbf16, #tpu.memory_space<vmem>>, vector<8x400xbf16>
    %c0_1 = arith.constant 0 : index
    %c0_2 = arith.constant 0 : index
    %1 = vector.load %arg2[%c0_1, %c0_2] : memref<400x128xbf16, #tpu.memory_space<vmem>>, vector<400x128xbf16>
    %cst = arith.constant dense<0.000000e+00> : vector<8x128xf32>
    %2 = tpu.matmul %0, %1, %cst {dimension_numbers = #tpu.dot_dimension_numbers<[1], [0], [0], [1], [0, 0, 1, 1], [], []>} : vector<8x400xbf16>, vector<400x128xbf16>, vector<8x128xf32> -> vector<8x128xf32>
    %c0_3 = arith.constant 0 : index
    %c0_4 = arith.constant 0 : index
    %3 = vector.load %arg3[%c0_3, %c0_4] : memref<8x1xf32, #tpu.memory_space<vmem>>, vector<8x1xf32>
    %4 = vector.broadcast %3 : vector<8x1xf32> to vector<8x128xf32>
    %5 = arith.addf %2, %4 : vector<8x128xf32>
    %c0_5 = arith.constant 0 : index
    %c0_6 = arith.constant 0 : index
    %6 = vector.load %arg4[%c0_5, %c0_6] : memref<8x128xf32, #tpu.memory_space<vmem>>, vector<8x128xf32>
    tpu.vector_store %arg4[%c0_5, %c0_6], %5 {strides = array<i32>} : memref<8x128xf32, #tpu.memory_space<vmem>>, vector<8x128xf32>,
    return
  }
  func.func @transform_0(%arg0: i32) -> (i32, i32) {
    %c0_i32 = arith.constant 0 : i32
    %c0_i32_0 = arith.constant 0 : i32
    %c0_i32_1 = arith.constant 0 : i32
    return %c0_i32, %c0_i32_0 : i32, i32
  }
  func.func @transform_1(%arg0: i32) -> (i32, i32) {
    %c0_i32 = arith.constant 0 : i32
    %c0_i32_0 = arith.constant 0 : i32
    return %c0_i32, %arg0 : i32, i32
  }
  func.func @transform_2(%arg0: i32) -> (i32, i32) {
    %c0_i32 = arith.constant 0 : i32
    %c0_i32_0 = arith.constant 0 : i32
    %c0_i32_1 = arith.constant 0 : i32
    return %c0_i32, %c0_i32_0 : i32, i32
  }
  func.func @transform_3(%arg0: i32) -> (i32, i32) {
    %c0_i32 = arith.constant 0 : i32
    %c0_i32_0 = arith.constant 0 : i32
    return %c0_i32, %arg0 : i32, i32
  }
}

module attributes {stable_mosaic.version = 11 : i64} {
  func.func @_matmul_bias_kernel(%arg0: i32, %arg1: memref<16x200xbf16, #tpu.memory_space<vmem>>, %arg2: memref<200x128xbf16, #tpu.memory_space<vmem>>, %arg3: memref<16x1xf32, #tpu.memory_space<vmem>>, %arg4: memref<16x128xf32, #tpu.memory_space<vmem>>) attributes {dimension_semantics = [#tpu.dimension_semantics<parallel>], iteration_bounds = array<i64: 1>, scalar_prefetch = 0 : i64, scratch_operands = 0 : i64, tpu.core_type = #tpu.core_type<tc>, window_params = [{pipeline_mode = #tpu.pipeline_mode<synchronous>, transform_indices = @transform_0, window_bounds = array<i64: 16, 200>}, {transform_indices = @transform_1, window_bounds = array<i64: 200, 128>}, {pipeline_mode = #tpu.pipeline_mode<synchronous>, transform_indices = @transform_2, window_bounds = array<i64: 16, 1>}, {transform_indices = @transform_3, window_bounds = array<i64: 16, 128>}]} {
    %c0 = arith.constant 0 : index
    %c0_0 = arith.constant 0 : index
    %0 = vector.load %arg1[%c0, %c0_0] : memref<16x200xbf16, #tpu.memory_space<vmem>>, vector<16x200xbf16>
    %c0_1 = arith.constant 0 : index
    %c0_2 = arith.constant 0 : index
    %1 = vector.load %arg2[%c0_1, %c0_2] : memref<200x128xbf16, #tpu.memory_space<vmem>>, vector<200x128xbf16>
    %cst = arith.constant dense<0.000000e+00> : vector<16x128xf32>
    %2 = tpu.matmul %0, %1, %cst {dimension_numbers = #tpu.dot_dimension_numbers<[1], [0], [0], [1], [0, 0, 1, 1], [], []>} : vector<16x200xbf16>, vector<200x128xbf16>, vector<16x128xf32> -> vector<16x128xf32>
    %c0_3 = arith.constant 0 : index
    %c0_4 = arith.constant 0 : index
    %3 = vector.load %arg3[%c0_3, %c0_4] : memref<16x1xf32, #tpu.memory_space<vmem>>, vector<16x1xf32>
    %4 = vector.broadcast %3 : vector<16x1xf32> to vector<16x128xf32>
    %5 = arith.addf %2, %4 : vector<16x128xf32>
    %cst_5 = arith.constant 0.000000e+00 : f32
    %6 = vector.broadcast %cst_5 : f32 to vector<16x128xf32>
    %7 = arith.maximumf %5, %6 : vector<16x128xf32>
    %c0_6 = arith.constant 0 : index
    %c0_7 = arith.constant 0 : index
    %8 = vector.load %arg4[%c0_6, %c0_7] : memref<16x128xf32, #tpu.memory_space<vmem>>, vector<16x128xf32>
    tpu.vector_store %arg4[%c0_6, %c0_7], %7 {strides = array<i32>} : memref<16x128xf32, #tpu.memory_space<vmem>>, vector<16x128xf32>,
    return
  }
  func.func @transform_0(%arg0: i32) -> (i32, i32) {
    %c0_i32 = arith.constant 0 : i32
    %c0_i32_0 = arith.constant 0 : i32
    %c0_i32_1 = arith.constant 0 : i32
    return %c0_i32, %c0_i32_0 : i32, i32
  }
  func.func @transform_1(%arg0: i32) -> (i32, i32) {
    %c0_i32 = arith.constant 0 : i32
    %c0_i32_0 = arith.constant 0 : i32
    return %c0_i32, %arg0 : i32, i32
  }
  func.func @transform_2(%arg0: i32) -> (i32, i32) {
    %c0_i32 = arith.constant 0 : i32
    %c0_i32_0 = arith.constant 0 : i32
    %c0_i32_1 = arith.constant 0 : i32
    return %c0_i32, %c0_i32_0 : i32, i32
  }
  func.func @transform_3(%arg0: i32) -> (i32, i32) {
    %c0_i32 = arith.constant 0 : i32
    %c0_i32_0 = arith.constant 0 : i32
    return %c0_i32, %arg0 : i32, i32
  }
}

module attributes {stable_mosaic.version = 11 : i64} {
  func.func @_matmul_bias_kernel(%arg0: i32, %arg1: memref<8x400xbf16, #tpu.memory_space<vmem>>, %arg2: memref<400x512xbf16, #tpu.memory_space<vmem>>, %arg3: memref<8x1xf32, #tpu.memory_space<vmem>>, %arg4: memref<8x512xf32, #tpu.memory_space<vmem>>) attributes {dimension_semantics = [#tpu.dimension_semantics<parallel>], iteration_bounds = array<i64: 1>, scalar_prefetch = 0 : i64, scratch_operands = 0 : i64, tpu.core_type = #tpu.core_type<tc>, window_params = [{pipeline_mode = #tpu.pipeline_mode<synchronous>, transform_indices = @transform_0, window_bounds = array<i64: 8, 400>}, {transform_indices = @transform_1, window_bounds = array<i64: 400, 512>}, {pipeline_mode = #tpu.pipeline_mode<synchronous>, transform_indices = @transform_2, window_bounds = array<i64: 8, 1>}, {transform_indices = @transform_3, window_bounds = array<i64: 8, 512>}]} {
    %c0 = arith.constant 0 : index
    %c0_0 = arith.constant 0 : index
    %0 = vector.load %arg1[%c0, %c0_0] : memref<8x400xbf16, #tpu.memory_space<vmem>>, vector<8x400xbf16>
    %c0_1 = arith.constant 0 : index
    %c0_2 = arith.constant 0 : index
    %1 = vector.load %arg2[%c0_1, %c0_2] : memref<400x512xbf16, #tpu.memory_space<vmem>>, vector<400x512xbf16>
    %cst = arith.constant dense<0.000000e+00> : vector<8x512xf32>
    %2 = tpu.matmul %0, %1, %cst {dimension_numbers = #tpu.dot_dimension_numbers<[1], [0], [0], [1], [0, 0, 1, 1], [], []>} : vector<8x400xbf16>, vector<400x512xbf16>, vector<8x512xf32> -> vector<8x512xf32>
    %c0_3 = arith.constant 0 : index
    %c0_4 = arith.constant 0 : index
    %3 = vector.load %arg3[%c0_3, %c0_4] : memref<8x1xf32, #tpu.memory_space<vmem>>, vector<8x1xf32>
    %4 = vector.broadcast %3 : vector<8x1xf32> to vector<8x512xf32>
    %5 = arith.addf %2, %4 : vector<8x512xf32>
    %c0_5 = arith.constant 0 : index
    %c0_6 = arith.constant 0 : index
    %6 = vector.load %arg4[%c0_5, %c0_6] : memref<8x512xf32, #tpu.memory_space<vmem>>, vector<8x512xf32>
    tpu.vector_store %arg4[%c0_5, %c0_6], %5 {strides = array<i32>} : memref<8x512xf32, #tpu.memory_space<vmem>>, vector<8x512xf32>,
    return
  }
  func.func @transform_0(%arg0: i32) -> (i32, i32) {
    %c0_i32 = arith.constant 0 : i32
    %c0_i32_0 = arith.constant 0 : i32
    %c0_i32_1 = arith.constant 0 : i32
    return %c0_i32, %c0_i32_0 : i32, i32
  }
  func.func @transform_1(%arg0: i32) -> (i32, i32) {
    %c0_i32 = arith.constant 0 : i32
    %c0_i32_0 = arith.constant 0 : i32
    return %c0_i32, %arg0 : i32, i32
  }
  func.func @transform_2(%arg0: i32) -> (i32, i32) {
    %c0_i32 = arith.constant 0 : i32
    %c0_i32_0 = arith.constant 0 : i32
    %c0_i32_1 = arith.constant 0 : i32
    return %c0_i32, %c0_i32_0 : i32, i32
  }
  func.func @transform_3(%arg0: i32) -> (i32, i32) {
    %c0_i32 = arith.constant 0 : i32
    %c0_i32_0 = arith.constant 0 : i32
    return %c0_i32, %arg0 : i32, i32
  }
}

module attributes {stable_mosaic.version = 11 : i64} {
  func.func @_mse_kernel(%arg0: i32, %arg1: memref<16x128xf32, #tpu.memory_space<vmem>>, %arg2: memref<16x128xf32, #tpu.memory_space<vmem>>, %arg3: memref<1x1xf32, #tpu.memory_space<vmem>>) attributes {dimension_semantics = [#tpu.dimension_semantics<arbitrary>], iteration_bounds = array<i64: 1>, scalar_prefetch = 0 : i64, scratch_operands = 0 : i64, tpu.core_type = #tpu.core_type<tc>, window_params = [{transform_indices = @transform_0, window_bounds = array<i64: 16, 128>}, {transform_indices = @transform_1, window_bounds = array<i64: 16, 128>}, {pipeline_mode = #tpu.pipeline_mode<synchronous>, transform_indices = @transform_2, window_bounds = array<i64: 1, 1>}]} {
    %c0_i32 = arith.constant 0 : i32
    %0 = arith.cmpi eq, %arg0, %c0_i32 : i32
    %1 = arith.extui %0 : i1 to i32
    %c0_i32_0 = arith.constant 0 : i32
    %2 = arith.cmpi ne, %1, %c0_i32_0 : i32
    scf.if %2 {
      %cst_9 = arith.constant 0.000000e+00 : f32
      %16 = vector.broadcast %cst_9 : f32 to vector<1x1xf32>
      %c0_10 = arith.constant 0 : index
      %c0_11 = arith.constant 0 : index
      %17 = vector.load %arg3[%c0_10, %c0_11] : memref<1x1xf32, #tpu.memory_space<vmem>>, vector<1x1xf32>
      tpu.vector_store %arg3[%c0_10, %c0_11], %16 {strides = array<i32>} : memref<1x1xf32, #tpu.memory_space<vmem>>, vector<1x1xf32>,
    } else {
    }
    %c0 = arith.constant 0 : index
    %c0_1 = arith.constant 0 : index
    %3 = vector.load %arg1[%c0, %c0_1] : memref<16x128xf32, #tpu.memory_space<vmem>>, vector<16x128xf32>
    %c0_2 = arith.constant 0 : index
    %c0_3 = arith.constant 0 : index
    %4 = vector.load %arg2[%c0_2, %c0_3] : memref<16x128xf32, #tpu.memory_space<vmem>>, vector<16x128xf32>
    %5 = arith.subf %3, %4 : vector<16x128xf32>
    %c0_4 = arith.constant 0 : index
    %c0_5 = arith.constant 0 : index
    %6 = vector.load %arg3[%c0_4, %c0_5] : memref<1x1xf32, #tpu.memory_space<vmem>>, vector<1x1xf32>
    %7 = arith.mulf %5, %5 : vector<16x128xf32>
    %8 = vector.shape_cast %7 : vector<16x128xf32> to vector<1x16x128xf32>
    %cst = arith.constant dense<0.000000e+00> : vector<1xf32>
    %9 = vector.multi_reduction <add>, %8, %cst [1, 2] : vector<1x16x128xf32> to vector<1xf32>
    %10 = vector.shape_cast %9 : vector<1xf32> to vector<1x1x1xf32>
    %11 = vector.extract %10[0, 0, 0] : f32 from vector<1x1x1xf32>
    %cst_6 = arith.constant 6.51041686E-4 : f32
    %12 = arith.mulf %11, %cst_6 : f32
    %13 = vector.broadcast %12 : f32 to vector<1x1xf32>
    %14 = arith.addf %6, %13 : vector<1x1xf32>
    %c0_7 = arith.constant 0 : index
    %c0_8 = arith.constant 0 : index
    %15 = vector.load %arg3[%c0_7, %c0_8] : memref<1x1xf32, #tpu.memory_space<vmem>>, vector<1x1xf32>
    tpu.vector_store %arg3[%c0_7, %c0_8], %14 {strides = array<i32>} : memref<1x1xf32, #tpu.memory_space<vmem>>, vector<1x1xf32>,
    return
  }
  func.func @transform_0(%arg0: i32) -> (i32, i32) {
    %c0_i32 = arith.constant 0 : i32
    %c0_i32_0 = arith.constant 0 : i32
    return %arg0, %c0_i32 : i32, i32
  }
  func.func @transform_1(%arg0: i32) -> (i32, i32) {
    %c0_i32 = arith.constant 0 : i32
    %c0_i32_0 = arith.constant 0 : i32
    return %arg0, %c0_i32 : i32, i32
  }
  func.func @transform_2(%arg0: i32) -> (i32, i32) {
    %c0_i32 = arith.constant 0 : i32
    %c0_i32_0 = arith.constant 0 : i32
    %c0_i32_1 = arith.constant 0 : i32
    return %c0_i32, %c0_i32_0 : i32, i32
  }
}

module attributes {stable_mosaic.version = 11 : i64} {
  func.func @_rate_kernel(%arg0: i32, %arg1: memref<8x32xf32, #tpu.memory_space<vmem>>, %arg2: memref<8x1xf32, #tpu.memory_space<vmem>>, %arg3: memref<8x1xf32, #tpu.memory_space<vmem>>, %arg4: memref<1x1xf32, #tpu.memory_space<vmem>>) attributes {dimension_semantics = [#tpu.dimension_semantics<arbitrary>], iteration_bounds = array<i64: 1>, scalar_prefetch = 0 : i64, scratch_operands = 0 : i64, tpu.core_type = #tpu.core_type<tc>, window_params = [{pipeline_mode = #tpu.pipeline_mode<synchronous>, transform_indices = @transform_0, window_bounds = array<i64: 8, 32>}, {pipeline_mode = #tpu.pipeline_mode<synchronous>, transform_indices = @transform_1, window_bounds = array<i64: 8, 1>}, {pipeline_mode = #tpu.pipeline_mode<synchronous>, transform_indices = @transform_2, window_bounds = array<i64: 8, 1>}, {pipeline_mode = #tpu.pipeline_mode<synchronous>, transform_indices = @transform_3, window_bounds = array<i64: 1, 1>}]} {
    %c0 = arith.constant 0 : index
    %c0_0 = arith.constant 0 : index
    %0 = vector.load %arg1[%c0, %c0_0] : memref<8x32xf32, #tpu.memory_space<vmem>>, vector<8x32xf32>
    %c0_1 = arith.constant 0 : index
    %c0_2 = arith.constant 0 : index
    %1 = vector.load %arg2[%c0_1, %c0_2] : memref<8x1xf32, #tpu.memory_space<vmem>>, vector<8x1xf32>
    %c0_3 = arith.constant 0 : index
    %c0_4 = arith.constant 0 : index
    %2 = vector.load %arg3[%c0_3, %c0_4] : memref<8x1xf32, #tpu.memory_space<vmem>>, vector<8x1xf32>
    %cst = arith.constant 5.000000e-01 : f32
    %3 = vector.broadcast %cst : f32 to vector<8x32xf32>
    %4 = arith.addf %0, %3 : vector<8x32xf32>
    %5 = vector.broadcast %1 : vector<8x1xf32> to vector<8x32xf32>
    %6 = arith.mulf %5, %4 : vector<8x32xf32>
    %7 = vector.broadcast %2 : vector<8x1xf32> to vector<8x32xf32>
    %8 = arith.addf %6, %7 : vector<8x32xf32>
    %9 = arith.negf %8 : vector<8x32xf32>
    %10 = math.exp %9 : vector<8x32xf32>
    %cst_5 = arith.constant 1.000000e+00 : f32
    %11 = vector.broadcast %cst_5 : f32 to vector<8x32xf32>
    %12 = arith.addf %11, %10 : vector<8x32xf32>
    %13 = arith.divf %11, %12 : vector<8x32xf32>
    %cst_6 = arith.constant 5.000000e-01 : f32
    %14 = vector.broadcast %cst_6 : f32 to vector<8x32xf32>
    %15 = arith.subf %0, %14 : vector<8x32xf32>
    %16 = vector.broadcast %1 : vector<8x1xf32> to vector<8x32xf32>
    %17 = arith.mulf %16, %15 : vector<8x32xf32>
    %18 = vector.broadcast %2 : vector<8x1xf32> to vector<8x32xf32>
    %19 = arith.addf %17, %18 : vector<8x32xf32>
    %20 = arith.negf %19 : vector<8x32xf32>
    %21 = math.exp %20 : vector<8x32xf32>
    %cst_7 = arith.constant 1.000000e+00 : f32
    %22 = vector.broadcast %cst_7 : f32 to vector<8x32xf32>
    %23 = arith.addf %22, %21 : vector<8x32xf32>
    %24 = arith.divf %22, %23 : vector<8x32xf32>
    %25 = arith.subf %13, %24 : vector<8x32xf32>
    %cst_8 = arith.constant 9.99999971E-10 : f32
    %26 = vector.broadcast %cst_8 : f32 to vector<8x32xf32>
    %27 = arith.maximumf %25, %26 : vector<8x32xf32>
    %28 = math.log %27 : vector<8x32xf32>
    %cst_9 = arith.constant 2.000000e+00 : f32
    %29 = math.log %cst_9 : f32
    %30 = vector.broadcast %29 : f32 to vector<8x32xf32>
    %31 = arith.divf %28, %30 : vector<8x32xf32>
    %cst_10 = arith.constant 0.000000e+00 : f32
    %32 = vector.broadcast %cst_10 : f32 to vector<8x32xf32>
    %33 = arith.subf %32, %31 : vector<8x32xf32>
    %34 = vector.shape_cast %33 : vector<8x32xf32> to vector<1x8x32xf32>
    %cst_11 = arith.constant dense<0.000000e+00> : vector<1xf32>
    %35 = vector.multi_reduction <add>, %34, %cst_11 [1, 2] : vector<1x8x32xf32> to vector<1xf32>
    %36 = vector.shape_cast %35 : vector<1xf32> to vector<1x1x1xf32>
    %37 = vector.extract %36[0, 0, 0] : f32 from vector<1x1x1xf32>
    %38 = vector.broadcast %37 : f32 to vector<1x1xf32>
    %c0_12 = arith.constant 0 : index
    %c0_13 = arith.constant 0 : index
    %39 = vector.load %arg4[%c0_12, %c0_13] : memref<1x1xf32, #tpu.memory_space<vmem>>, vector<1x1xf32>
    tpu.vector_store %arg4[%c0_12, %c0_13], %38 {strides = array<i32>} : memref<1x1xf32, #tpu.memory_space<vmem>>, vector<1x1xf32>,
    return
  }
  func.func @transform_0(%arg0: i32) -> (i32, i32) {
    %c0_i32 = arith.constant 0 : i32
    %c0_i32_0 = arith.constant 0 : i32
    %c0_i32_1 = arith.constant 0 : i32
    return %c0_i32, %c0_i32_0 : i32, i32
  }
  func.func @transform_1(%arg0: i32) -> (i32, i32) {
    %c0_i32 = arith.constant 0 : i32
    %c0_i32_0 = arith.constant 0 : i32
    %c0_i32_1 = arith.constant 0 : i32
    return %c0_i32, %c0_i32_0 : i32, i32
  }
  func.func @transform_2(%arg0: i32) -> (i32, i32) {
    %c0_i32 = arith.constant 0 : i32
    %c0_i32_0 = arith.constant 0 : i32
    %c0_i32_1 = arith.constant 0 : i32
    return %c0_i32, %c0_i32_0 : i32, i32
  }
  func.func @transform_3(%arg0: i32) -> (i32, i32) {
    %c0_i32 = arith.constant 0 : i32
    %c0_i32_0 = arith.constant 0 : i32
    %c0_i32_1 = arith.constant 0 : i32
    return %c0_i32, %c0_i32_0 : i32, i32
  }
}

</mosaic_0001>

<llo_original>
// kernel: net_forward.6
$region0: #{net_forward.6}
  #allocation0 [shape = 'u32[]', space=smem, size = 0x4, offset = 0x4, fixed_abs, tag = 'smem constant byte address 0x4 - core index']
  #allocation1 [shape = 'u32[144,128]{1,0:T(1,128)}', space=vmem, size = 0x12000, scoped, tag = 'internal scratch']
  %s0 = inlined_call_operand.vmem [shape: bf16[16,75], index: 0, kind: input, shape index: {}]
  %s1 = inlined_call_operand.vmem [shape: bf16[75,128], index: 1, kind: input, shape index: {}]
  %s2 = inlined_call_operand.vmem [shape: f32[16,1], index: 2, kind: input, shape index: {}]
  %s3 = inlined_call_operand.vmem [shape: f32[16,128], index: 3, kind: output, shape index: {}]
  %s4 = sld [smem:[#allocation0]]
  $region22: #{net_forward.6} parent=0
    _
  %s6 = ssub.s32 1, %s4
  %s7 = scalar_select 0, %s6, %s4
  // Predicated region
  $region2: #{net_forward.6} parent=0 // pred_check
    _
  $region3: #{net_forward.6} parent=0 // pred_check_branch
    %9 = sbr.rel (0) target = $region5
  $region4: #{net_forward.6} parent=0 // pred_region
    _
  $region5: #{net_forward.6} parent=0 // pred_fallthru
    _
  // Predicated region
  $region6: #{net_forward.6} parent=0 // pred_check
    _
  $region7: #{net_forward.6} parent=0 // pred_check_branch
    %11 = sbr.rel (0) target = $region9
  $region8: #{net_forward.6} parent=0 // pred_region
    _
  $region9: #{net_forward.6} parent=0 // pred_fallthru
    _
  // Predicated region
  $region10: #{net_forward.6} parent=0 // pred_check
    _
  $region11: #{net_forward.6} parent=0 // pred_check_branch
    %13 = sbr.rel (0) target = $region13
  $region12: #{net_forward.6} parent=0 // pred_region
    _
  $region13: #{net_forward.6} parent=0 // pred_fallthru
    _
  %v15 = vld [vmem:[%s0] sm:$0xf]
  %v16 = vld [vmem:[%s0 + $0x4] sm:$0xf]
  %v17 = vld [vmem:[%s1] sm:$0xf]
  %v18 = vld [vmem:[%s1 + $0x4] sm:$0xf]
  %v19 = vld [vmem:[%s1 + $0x8] sm:$0xf]
  %v20 = vld [vmem:[%s1 + $0xc] sm:$0xf]
  %v21 = vld [vmem:[%s1 + $0x10] sm:$0xf]
  %v22 = vld [vmem:[%s1 + $0x14] sm:$0xf]
  %v23 = vld [vmem:[%s1 + $0x18] sm:$0xf]
  %v24 = vld [vmem:[%s1 + $0x1c] sm:$0xf]
  %v25 = vld [vmem:[%s1 + $0x20] sm:$0xf]
  %v26 = vld [vmem:[%s1 + $0x24] sm:$0x3]
  %v27 = vld [vmem:[%s2] sm:$0xff]
  %v28 = vld [vmem:[%s2 + $0x8] sm:$0xff]
  %30 = vset.pattern.permute.xlu0 0
  %31 = vperm.xlu0 %30, %v27
  %v32 = vpop.permute.xlu0 %31
  %35 = vset.pattern.permute.xlu0 0
  %36 = vperm.xlu0 %35, %v28
  %v37 = vpop.permute.xlu0 %36
  %v41 = vunpack.c.l.b16 %v15
  %v42 = vunpack.c.l.b16 %v16
  %v43 = vpack.c.b16 %v42, %v41
  %v54 = vunpack.c.l.b16 %v17
  %v55 = vunpack.c.l.b16 %v18
  %v56 = vunpack.c.l.b16 %v19
  %v57 = vunpack.c.l.b16 %v20
  %v58 = vunpack.c.l.b16 %v21
  %v59 = vunpack.c.l.b16 %v22
  %v60 = vunpack.c.l.b16 %v23
  %v61 = vunpack.c.l.b16 %v24
  %v62 = vunpack.c.l.b16 %v25
  %v63 = vunpack.c.l.b16 %v26
  %v64 = vpack.c.b16 %v55, %v54
  %v65 = vpack.c.b16 %v57, %v56
  %v66 = vpack.c.b16 %v59, %v58
  %v67 = vpack.c.b16 %v61, %v60
  %v68 = vpack.c.b16 %v63, %v62
  %vm73 = vcmask 613376
  %v75 = vsel %vm73, %v43, 0
  %vm77 = vcmask 1044480
  %vm78 = vcmask 1045504
  %v79 = vsel %vm77, 4294967295, 65535
  %v80 = vsel %vm78, %v79, 0
  %v82 = vand.u32 %v68, %v80
  %84 = vmatprep.subr.bf16.mxu0 0
  %85 = vmatpush1.bf16.msra.mxu0 %v64
  %86 = vmatprep.subr.bf16.mxu0 0
  %87 = vmatpush1.bf16.msra.mxu0 %v65
  %88 = vmatprep.subr.bf16.mxu0 0
  %89 = vmatpush1.bf16.msra.mxu0 %v66
  %90 = vmatprep.subr.bf16.mxu0 0
  %91 = vmatpush1.bf16.msra.mxu0 %v67
  %92 = vmatprep.subr.bf16.mxu0 0
  %93 = vmatpush1.bf16.msra.mxu0 %v82
  %94 = vmatprep.subr.bf16.mxu0 0
  %95 = vmatpush1.bf16.msra.mxu0 0
  %96 = vmatprep.subr.bf16.mxu0 0
  %97 = vmatpush1.bf16.msra.mxu0 0
  %98 = vmatprep.subr.bf16.mxu0 0
  %99 = vmatpush1.bf16.msra.mxu0 0
  %100 = vmatprep.subr.bf16.mxu0 0
  %101 = vmatpush1.bf16.msra.mxu0 0
  %102 = vmatprep.subr.bf16.mxu0 0
  %103 = vmatpush1.bf16.msra.mxu0 0
  %104 = vmatprep.subr.bf16.mxu0 0
  %105 = vmatpush1.bf16.msra.mxu0 0
  %106 = vmatprep.subr.bf16.mxu0 0
  %107 = vmatpush1.bf16.msra.mxu0 0
  %108 = vmatprep.subr.bf16.mxu0 0
  %109 = vmatpush1.bf16.msra.mxu0 0
  %110 = vmatprep.subr.bf16.mxu0 0
  %111 = vmatpush1.bf16.msra.mxu0 0
  %112 = vmatprep.subr.bf16.mxu0 0
  %113 = vmatpush1.bf16.msra.mxu0 0
  %114 = vmatprep.subr.bf16.mxu0 0
  %115 = vmatpush1.bf16.msra.mxu0 0
  %116 = vmatprep.mubr.bf16.mxu0 0
  %117 = vmatmul.mubr.bf16.gmra.mrb[0].mxu0 %v75
  %v118 = vpop.f32.mrb[0].mxu0
  %v119 = vadd.f32 %v32, %v118
  %v120 = vpop.f32.mrb[0].mxu0
  %v121 = vpop.f32.mrb[0].mxu0
  %v122 = vadd.f32 %v37, %v121
  %v123 = vpop.f32.mrb[0].mxu0
  %124 = vdwg.mxu0
  %v125 = vmax.f32 %v119, 0.0
  %v126 = vmax.f32 %v122, 0.0
  %127 = vst [vmem:[%s3] sm:$0xff] %v125
  %128 = vst [vmem:[%s3 + $0x8] sm:$0xff] %v126
  // Predicated region
  $region14: #{net_forward.6} parent=0 // pred_check
    _
  $region15: #{net_forward.6} parent=0 // pred_check_branch
    %130 = sbr.rel (0) target = $region17
  $region16: #{net_forward.6} parent=0 // pred_region
    _
  $region17: #{net_forward.6} parent=0 // pred_fallthru
    _
  // Predicated region
  $region18: #{net_forward.6} parent=0 // pred_check
    _
  $region19: #{net_forward.6} parent=0 // pred_check_branch
    %132 = sbr.rel (0) target = $region21
  $region20: #{net_forward.6} parent=0 // pred_region
    _
  $region21: #{net_forward.6} parent=0 // pred_fallthru
    _

// kernel: net_forward.7
$region0: #{net_forward.7}
  #allocation0 [shape = 'u32[]', space=smem, size = 0x4, offset = 0x4, fixed_abs, tag = 'smem constant byte address 0x4 - core index']
  #allocation1 [shape = 'u32[144,128]{1,0:T(1,128)}', space=vmem, size = 0x12000, scoped, tag = 'internal scratch']
  %s0 = inlined_call_operand.vmem [shape: bf16[8,400], index: 0, kind: input, shape index: {}]
  %s1 = inlined_call_operand.vmem [shape: bf16[400,128], index: 1, kind: input, shape index: {}]
  %s2 = inlined_call_operand.vmem [shape: f32[8,1], index: 2, kind: input, shape index: {}]
  %s3 = inlined_call_operand.vmem [shape: f32[8,128], index: 3, kind: output, shape index: {}]
  %s4 = sld [smem:[#allocation0]]
  $region22: #{net_forward.7} parent=0
    _
  %s6 = ssub.s32 1, %s4
  %s7 = scalar_select 0, %s6, %s4
  // Predicated region
  $region2: #{net_forward.7} parent=0 // pred_check
    _
  $region3: #{net_forward.7} parent=0 // pred_check_branch
    %9 = sbr.rel (0) target = $region5
  $region4: #{net_forward.7} parent=0 // pred_region
    _
  $region5: #{net_forward.7} parent=0 // pred_fallthru
    _
  // Predicated region
  $region6: #{net_forward.7} parent=0 // pred_check
    _
  $region7: #{net_forward.7} parent=0 // pred_check_branch
    %11 = sbr.rel (0) target = $region9
  $region8: #{net_forward.7} parent=0 // pred_region
    _
  $region9: #{net_forward.7} parent=0 // pred_fallthru
    _
  // Predicated region
  $region10: #{net_forward.7} parent=0 // pred_check
    _
  $region11: #{net_forward.7} parent=0 // pred_check_branch
    %13 = sbr.rel (0) target = $region13
  $region12: #{net_forward.7} parent=0 // pred_region
    _
  $region13: #{net_forward.7} parent=0 // pred_fallthru
    _
  %v15 = vld [vmem:[%s0] sm:$0xff]
  %v16 = vld [vmem:[%s0 + $0x8] sm:$0xff]
  %v17 = vld [vmem:[%s1] sm:$0xf]
  %v18 = vld [vmem:[%s1 + $0x4] sm:$0xf]
  %v19 = vld [vmem:[%s1 + $0x8] sm:$0xf]
  %v20 = vld [vmem:[%s1 + $0xc] sm:$0xf]
  %v21 = vld [vmem:[%s1 + $0x10] sm:$0xf]
  %v22 = vld [vmem:[%s1 + $0x14] sm:$0xf]
  %v23 = vld [vmem:[%s1 + $0x18] sm:$0xf]
  %v24 = vld [vmem:[%s1 + $0x1c] sm:$0xf]
  %v25 = vld [vmem:[%s1 + $0x20] sm:$0xf]
  %v26 = vld [vmem:[%s1 + $0x24] sm:$0xf]
  %v27 = vld [vmem:[%s1 + $0x28] sm:$0xf]
  %v28 = vld [vmem:[%s1 + $0x2c] sm:$0xf]
  %v29 = vld [vmem:[%s1 + $0x30] sm:$0xf]
  %v30 = vld [vmem:[%s1 + $0x34] sm:$0xf]
  %v31 = vld [vmem:[%s1 + $0x38] sm:$0xf]
  %v32 = vld [vmem:[%s1 + $0x3c] sm:$0xf]
  %v33 = vld [vmem:[%s1 + $0x40] sm:$0xf]
  %v34 = vld [vmem:[%s1 + $0x44] sm:$0xf]
  %v35 = vld [vmem:[%s1 + $0x48] sm:$0xf]
  %v36 = vld [vmem:[%s1 + $0x4c] sm:$0xf]
  %v37 = vld [vmem:[%s1 + $0x50] sm:$0xf]
  %v38 = vld [vmem:[%s1 + $0x54] sm:$0xf]
  %v39 = vld [vmem:[%s1 + $0x58] sm:$0xf]
  %v40 = vld [vmem:[%s1 + $0x5c] sm:$0xf]
  %v41 = vld [vmem:[%s1 + $0x60] sm:$0xf]
  %v42 = vld [vmem:[%s1 + $0x64] sm:$0xf]
  %v43 = vld [vmem:[%s1 + $0x68] sm:$0xf]
  %v44 = vld [vmem:[%s1 + $0x6c] sm:$0xf]
  %v45 = vld [vmem:[%s1 + $0x70] sm:$0xf]
  %v46 = vld [vmem:[%s1 + $0x74] sm:$0xf]
  %v47 = vld [vmem:[%s1 + $0x78] sm:$0xf]
  %v48 = vld [vmem:[%s1 + $0x7c] sm:$0xf]
  %v49 = vld [vmem:[%s1 + $0x80] sm:$0xf]
  %v50 = vld [vmem:[%s1 + $0x84] sm:$0xf]
  %v51 = vld [vmem:[%s1 + $0x88] sm:$0xf]
  %v52 = vld [vmem:[%s1 + $0x8c] sm:$0xf]
  %v53 = vld [vmem:[%s1 + $0x90] sm:$0xf]
  %v54 = vld [vmem:[%s1 + $0x94] sm:$0xf]
  %v55 = vld [vmem:[%s1 + $0x98] sm:$0xf]
  %v56 = vld [vmem:[%s1 + $0x9c] sm:$0xf]
  %v57 = vld [vmem:[%s1 + $0xa0] sm:$0xf]
  %v58 = vld [vmem:[%s1 + $0xa4] sm:$0xf]
  %v59 = vld [vmem:[%s1 + $0xa8] sm:$0xf]
  %v60 = vld [vmem:[%s1 + $0xac] sm:$0xf]
  %v61 = vld [vmem:[%s1 + $0xb0] sm:$0xf]
  %v62 = vld [vmem:[%s1 + $0xb4] sm:$0xf]
  %v63 = vld [vmem:[%s1 + $0xb8] sm:$0xf]
  %v64 = vld [vmem:[%s1 + $0xbc] sm:$0xf]
  %v65 = vld [vmem:[%s1 + $0xc0] sm:$0xf]
  %v66 = vld [vmem:[%s1 + $0xc4] sm:$0xf]
  %v67 = vld [vmem:[%s2] sm:$0xff]
  %69 = vset.pattern.permute.xlu0 0
  %70 = vperm.xlu0 %69, %v67
  %v71 = vpop.permute.xlu0 %70
  %v75 = vunpack.c.l.b16 %v15
  %v76 = vunpack.c.h.b16 %v15
  %v77 = vunpack.c.l.b16 %v16
  %v78 = vunpack.c.h.b16 %v16
  %v79 = vpack.c.b16 %v75, %v75
  %v80 = vpack.c.b16 %v76, %v76
  %v81 = vpack.c.b16 %v77, %v77
  %v82 = vpack.c.b16 %v78, %v78
  %v136 = vunpack.c.l.b16 %v17
  %v137 = vunpack.c.l.b16 %v18
  %v138 = vunpack.c.l.b16 %v19
  %v139 = vunpack.c.l.b16 %v20
  %v140 = vunpack.c.l.b16 %v21
  %v141 = vunpack.c.l.b16 %v22
  %v142 = vunpack.c.l.b16 %v23
  %v143 = vunpack.c.l.b16 %v24
  %v144 = vunpack.c.l.b16 %v25
  %v145 = vunpack.c.l.b16 %v26
  %v146 = vunpack.c.l.b16 %v27
  %v147 = vunpack.c.l.b16 %v28
  %v148 = vunpack.c.l.b16 %v29
  %v149 = vunpack.c.l.b16 %v30
  %v150 = vunpack.c.l.b16 %v31
  %v151 = vunpack.c.l.b16 %v32
  %v152 = vunpack.c.l.b16 %v33
  %v153 = vunpack.c.l.b16 %v34
  %v154 = vunpack.c.l.b16 %v35
  %v155 = vunpack.c.l.b16 %v36
  %v156 = vunpack.c.l.b16 %v37
  %v157 = vunpack.c.l.b16 %v38
  %v158 = vunpack.c.l.b16 %v39
  %v159 = vunpack.c.l.b16 %v40
  %v160 = vunpack.c.l.b16 %v41
  %v161 = vunpack.c.l.b16 %v42
  %v162 = vunpack.c.l.b16 %v43
  %v163 = vunpack.c.l.b16 %v44
  %v164 = vunpack.c.l.b16 %v45
  %v165 = vunpack.c.l.b16 %v46
  %v166 = vunpack.c.l.b16 %v47
  %v167 = vunpack.c.l.b16 %v48
  %v168 = vunpack.c.l.b16 %v49
  %v169 = vunpack.c.l.b16 %v50
  %v170 = vunpack.c.l.b16 %v51
  %v171 = vunpack.c.l.b16 %v52
  %v172 = vunpack.c.l.b16 %v53
  %v173 = vunpack.c.l.b16 %v54
  %v174 = vunpack.c.l.b16 %v55
  %v175 = vunpack.c.l.b16 %v56
  %v176 = vunpack.c.l.b16 %v57
  %v177 = vunpack.c.l.b16 %v58
  %v178 = vunpack.c.l.b16 %v59
  %v179 = vunpack.c.l.b16 %v60
  %v180 = vunpack.c.l.b16 %v61
  %v181 = vunpack.c.l.b16 %v62
  %v182 = vunpack.c.l.b16 %v63
  %v183 = vunpack.c.l.b16 %v64
  %v184 = vunpack.c.l.b16 %v65
  %v185 = vunpack.c.l.b16 %v66
  %v186 = vpack.c.b16 %v137, %v136
  %v187 = vpack.c.b16 %v139, %v138
  %v188 = vpack.c.b16 %v141, %v140
  %v189 = vpack.c.b16 %v143, %v142
  %v190 = vpack.c.b16 %v145, %v144
  %v191 = vpack.c.b16 %v147, %v146
  %v192 = vpack.c.b16 %v149, %v148
  %v193 = vpack.c.b16 %v151, %v150
  %v194 = vpack.c.b16 %v153, %v152
  %v195 = vpack.c.b16 %v155, %v154
  %v196 = vpack.c.b16 %v157, %v156
  %v197 = vpack.c.b16 %v159, %v158
  %v198 = vpack.c.b16 %v161, %v160
  %v199 = vpack.c.b16 %v163, %v162
  %v200 = vpack.c.b16 %v165, %v164
  %v201 = vpack.c.b16 %v167, %v166
  %v202 = vpack.c.b16 %v169, %v168
  %v203 = vpack.c.b16 %v171, %v170
  %v204 = vpack.c.b16 %v173, %v172
  %v205 = vpack.c.b16 %v175, %v174
  %v206 = vpack.c.b16 %v177, %v176
  %v207 = vpack.c.b16 %v179, %v178
  %v208 = vpack.c.b16 %v181, %v180
  %v209 = vpack.c.b16 %v183, %v182
  %v210 = vpack.c.b16 %v185, %v184
  %vm236 = vcmask 130048
  %v238 = vsel %vm236, %v82, 0
  %240 = vmatprep.subr.bf16.mxu0 0
  %241 = vmatpush1.bf16.msra.mxu0 %v186
  %242 = vmatprep.subr.bf16.mxu0 0
  %243 = vmatpush1.bf16.msra.mxu0 %v187
  %244 = vmatprep.subr.bf16.mxu0 0
  %245 = vmatpush1.bf16.msra.mxu0 %v188
  %246 = vmatprep.subr.bf16.mxu0 0
  %247 = vmatpush1.bf16.msra.mxu0 %v189
  %248 = vmatprep.subr.bf16.mxu0 0
  %249 = vmatpush1.bf16.msra.mxu0 %v190
  %250 = vmatprep.subr.bf16.mxu0 0
  %251 = vmatpush1.bf16.msra.mxu0 %v191
  %252 = vmatprep.subr.bf16.mxu0 0
  %253 = vmatpush1.bf16.msra.mxu0 %v192
  %254 = vmatprep.subr.bf16.mxu0 0
  %255 = vmatpush1.bf16.msra.mxu0 %v193
  %256 = vmatprep.subr.bf16.mxu0 0
  %257 = vmatpush1.bf16.msra.mxu0 %v194
  %258 = vmatprep.subr.bf16.mxu0 0
  %259 = vmatpush1.bf16.msra.mxu0 %v195
  %260 = vmatprep.subr.bf16.mxu0 0
  %261 = vmatpush1.bf16.msra.mxu0 %v196
  %262 = vmatprep.subr.bf16.mxu0 0
  %263 = vmatpush1.bf16.msra.mxu0 %v197
  %264 = vmatprep.subr.bf16.mxu0 0
  %265 = vmatpush1.bf16.msra.mxu0 %v198
  %266 = vmatprep.subr.bf16.mxu0 0
  %267 = vmatpush1.bf16.msra.mxu0 %v199
  %268 = vmatprep.subr.bf16.mxu0 0
  %269 = vmatpush1.bf16.msra.mxu0 %v200
  %270 = vmatprep.subr.bf16.mxu0 0
  %271 = vmatpush1.bf16.msra.mxu0 %v201
  %272 = vmatprep.mubr.bf16.mxu0 %v80
  %273 = vmatmul.mubr.bf16.gmra.mrb[0].mxu0 %v79
  %v274 = vpop.f32.mrb[0].mxu0
  %v275 = vadd.f32 %v71, %v274
  %v276 = vpop.f32.mrb[0].mxu0
  %v277 = vpop.f32.mrb[0].mxu0
  %v278 = vpop.f32.mrb[0].mxu0
  %279 = vdwg.mxu0
  %280 = vmatprep.subr.bf16.mxu0 0
  %281 = vmatpush1.bf16.msra.mxu0 %v202
  %282 = vmatprep.subr.bf16.mxu0 0
  %283 = vmatpush1.bf16.msra.mxu0 %v203
  %284 = vmatprep.subr.bf16.mxu0 0
  %285 = vmatpush1.bf16.msra.mxu0 %v204
  %286 = vmatprep.subr.bf16.mxu0 0
  %287 = vmatpush1.bf16.msra.mxu0 %v205
  %288 = vmatprep.subr.bf16.mxu0 0
  %289 = vmatpush1.bf16.msra.mxu0 %v206
  %290 = vmatprep.subr.bf16.mxu0 0
  %291 = vmatpush1.bf16.msra.mxu0 %v207
  %292 = vmatprep.subr.bf16.mxu0 0
  %293 = vmatpush1.bf16.msra.mxu0 %v208
  %294 = vmatprep.subr.bf16.mxu0 0
  %295 = vmatpush1.bf16.msra.mxu0 %v209
  %296 = vmatprep.subr.bf16.mxu0 0
  %297 = vmatpush1.bf16.msra.mxu0 %v210
  %298 = vmatprep.subr.bf16.mxu0 0
  %299 = vmatpush1.bf16.msra.mxu0 0
  %300 = vmatprep.subr.bf16.mxu0 0
  %301 = vmatpush1.bf16.msra.mxu0 0
  %302 = vmatprep.subr.bf16.mxu0 0
  %303 = vmatpush1.bf16.msra.mxu0 0
  %304 = vmatprep.subr.bf16.mxu0 0
  %305 = vmatpush1.bf16.msra.mxu0 0
  %306 = vmatprep.subr.bf16.mxu0 0
  %307 = vmatpush1.bf16.msra.mxu0 0
  %308 = vmatprep.subr.bf16.mxu0 0
  %309 = vmatpush1.bf16.msra.mxu0 0
  %310 = vmatprep.subr.bf16.mxu0 0
  %311 = vmatpush1.bf16.msra.mxu0 0
  %312 = vmatprep.mubr.bf16.mxu0 %v238
  %313 = vmatmul.mubr.bf16.gmra.mrb[0].mxu0 %v81
  %v314 = vpop.f32.mrb[0].mxu0
  %v315 = vadd.f32 %v275, %v314
  %v316 = vpop.f32.mrb[0].mxu0
  %v317 = vpop.f32.mrb[0].mxu0
  %v318 = vpop.f32.mrb[0].mxu0
  %319 = vdwg.mxu0
  %320 = vst [vmem:[%s3] sm:$0xff] %v315
  // Predicated region
  $region14: #{net_forward.7} parent=0 // pred_check
    _
  $region15: #{net_forward.7} parent=0 // pred_check_branch
    %322 = sbr.rel (0) target = $region17
  $region16: #{net_forward.7} parent=0 // pred_region
    _
  $region17: #{net_forward.7} parent=0 // pred_fallthru
    _
  // Predicated region
  $region18: #{net_forward.7} parent=0 // pred_check
    _
  $region19: #{net_forward.7} parent=0 // pred_check_branch
    %324 = sbr.rel (0) target = $region21
  $region20: #{net_forward.7} parent=0 // pred_region
    _
  $region21: #{net_forward.7} parent=0 // pred_fallthru
    _

// kernel: net_forward.9
$region0: #{net_forward.9}
  #allocation0 [shape = 'u32[]', space=smem, size = 0x4, offset = 0x4, fixed_abs, tag = 'smem constant byte address 0x4 - core index']
  #allocation1 [shape = 'u32[144,128]{1,0:T(1,128)}', space=vmem, size = 0x12000, scoped, tag = 'internal scratch']
  %s0 = inlined_call_operand.vmem [shape: bf16[16,200], index: 0, kind: input, shape index: {}]
  %s1 = inlined_call_operand.vmem [shape: bf16[200,128], index: 1, kind: input, shape index: {}]
  %s2 = inlined_call_operand.vmem [shape: f32[16,1], index: 2, kind: input, shape index: {}]
  %s3 = inlined_call_operand.vmem [shape: f32[16,128], index: 3, kind: output, shape index: {}]
  %s4 = sld [smem:[#allocation0]]
  $region22: #{net_forward.9} parent=0
    _
  %s6 = ssub.s32 1, %s4
  %s7 = scalar_select 0, %s6, %s4
  // Predicated region
  $region2: #{net_forward.9} parent=0 // pred_check
    _
  $region3: #{net_forward.9} parent=0 // pred_check_branch
    %9 = sbr.rel (0) target = $region5
  $region4: #{net_forward.9} parent=0 // pred_region
    _
  $region5: #{net_forward.9} parent=0 // pred_fallthru
    _
  // Predicated region
  $region6: #{net_forward.9} parent=0 // pred_check
    _
  $region7: #{net_forward.9} parent=0 // pred_check_branch
    %11 = sbr.rel (0) target = $region9
  $region8: #{net_forward.9} parent=0 // pred_region
    _
  $region9: #{net_forward.9} parent=0 // pred_fallthru
    _
  // Predicated region
  $region10: #{net_forward.9} parent=0 // pred_check
    _
  $region11: #{net_forward.9} parent=0 // pred_check_branch
    %13 = sbr.rel (0) target = $region13
  $region12: #{net_forward.9} parent=0 // pred_region
    _
  $region13: #{net_forward.9} parent=0 // pred_fallthru
    _
  %v15 = vld [vmem:[%s0] sm:$0xff]
  %v16 = vld [vmem:[%s0 + $0x8] sm:$0xff]
  %v17 = vld [vmem:[%s1] sm:$0xf]
  %v18 = vld [vmem:[%s1 + $0x4] sm:$0xf]
  %v19 = vld [vmem:[%s1 + $0x8] sm:$0xf]
  %v20 = vld [vmem:[%s1 + $0xc] sm:$0xf]
  %v21 = vld [vmem:[%s1 + $0x10] sm:$0xf]
  %v22 = vld [vmem:[%s1 + $0x14] sm:$0xf]
  %v23 = vld [vmem:[%s1 + $0x18] sm:$0xf]
  %v24 = vld [vmem:[%s1 + $0x1c] sm:$0xf]
  %v25 = vld [vmem:[%s1 + $0x20] sm:$0xf]
  %v26 = vld [vmem:[%s1 + $0x24] sm:$0xf]
  %v27 = vld [vmem:[%s1 + $0x28] sm:$0xf]
  %v28 = vld [vmem:[%s1 + $0x2c] sm:$0xf]
  %v29 = vld [vmem:[%s1 + $0x30] sm:$0xf]
  %v30 = vld [vmem:[%s1 + $0x34] sm:$0xf]
  %v31 = vld [vmem:[%s1 + $0x38] sm:$0xf]
  %v32 = vld [vmem:[%s1 + $0x3c] sm:$0xf]
  %v33 = vld [vmem:[%s1 + $0x40] sm:$0xf]
  %v34 = vld [vmem:[%s1 + $0x44] sm:$0xf]
  %v35 = vld [vmem:[%s1 + $0x48] sm:$0xf]
  %v36 = vld [vmem:[%s1 + $0x4c] sm:$0xf]
  %v37 = vld [vmem:[%s1 + $0x50] sm:$0xf]
  %v38 = vld [vmem:[%s1 + $0x54] sm:$0xf]
  %v39 = vld [vmem:[%s1 + $0x58] sm:$0xf]
  %v40 = vld [vmem:[%s1 + $0x5c] sm:$0xf]
  %v41 = vld [vmem:[%s1 + $0x60] sm:$0xf]
  %v42 = vld [vmem:[%s2] sm:$0xff]
  %v43 = vld [vmem:[%s2 + $0x8] sm:$0xff]
  %45 = vset.pattern.permute.xlu0 0
  %46 = vperm.xlu0 %45, %v42
  %v47 = vpop.permute.xlu0 %46
  %50 = vset.pattern.permute.xlu0 0
  %51 = vperm.xlu0 %50, %v43
  %v52 = vpop.permute.xlu0 %51
  %v56 = vunpack.c.l.b16 %v15
  %v57 = vunpack.c.h.b16 %v15
  %v58 = vunpack.c.l.b16 %v16
  %v59 = vunpack.c.h.b16 %v16
  %v60 = vpack.c.b16 %v58, %v56
  %v61 = vpack.c.b16 %v59, %v57
  %v88 = vunpack.c.l.b16 %v17
  %v89 = vunpack.c.l.b16 %v18
  %v90 = vunpack.c.l.b16 %v19
  %v91 = vunpack.c.l.b16 %v20
  %v92 = vunpack.c.l.b16 %v21
  %v93 = vunpack.c.l.b16 %v22
  %v94 = vunpack.c.l.b16 %v23
  %v95 = vunpack.c.l.b16 %v24
  %v96 = vunpack.c.l.b16 %v25
  %v97 = vunpack.c.l.b16 %v26
  %v98 = vunpack.c.l.b16 %v27
  %v99 = vunpack.c.l.b16 %v28
  %v100 = vunpack.c.l.b16 %v29
  %v101 = vunpack.c.l.b16 %v30
  %v102 = vunpack.c.l.b16 %v31
  %v103 = vunpack.c.l.b16 %v32
  %v104 = vunpack.c.l.b16 %v33
  %v105 = vunpack.c.l.b16 %v34
  %v106 = vunpack.c.l.b16 %v35
  %v107 = vunpack.c.l.b16 %v36
  %v108 = vunpack.c.l.b16 %v37
  %v109 = vunpack.c.l.b16 %v38
  %v110 = vunpack.c.l.b16 %v39
  %v111 = vunpack.c.l.b16 %v40
  %v112 = vunpack.c.l.b16 %v41
  %v113 = vpack.c.b16 %v89, %v88
  %v114 = vpack.c.b16 %v91, %v90
  %v115 = vpack.c.b16 %v93, %v92
  %v116 = vpack.c.b16 %v95, %v94
  %v117 = vpack.c.b16 %v97, %v96
  %v118 = vpack.c.b16 %v99, %v98
  %v119 = vpack.c.b16 %v101, %v100
  %v120 = vpack.c.b16 %v103, %v102
  %v121 = vpack.c.b16 %v105, %v104
  %v122 = vpack.c.b16 %v107, %v106
  %v123 = vpack.c.b16 %v109, %v108
  %v124 = vpack.c.b16 %v111, %v110
  %v125 = vpack.c.b16 %v112, %v112
  %vm138 = vcmask 588800
  %v140 = vsel %vm138, %v61, 0
  %vm142 = vcmask 1043456
  %v144 = vsel %vm142, %v125, 0
  %146 = vmatprep.subr.bf16.mxu0 0
  %147 = vmatpush1.bf16.msra.mxu0 %v113
  %148 = vmatprep.subr.bf16.mxu0 0
  %149 = vmatpush1.bf16.msra.mxu0 %v114
  %150 = vmatprep.subr.bf16.mxu0 0
  %151 = vmatpush1.bf16.msra.mxu0 %v115
  %152 = vmatprep.subr.bf16.mxu0 0
  %153 = vmatpush1.bf16.msra.mxu0 %v116
  %154 = vmatprep.subr.bf16.mxu0 0
  %155 = vmatpush1.bf16.msra.mxu0 %v117
  %156 = vmatprep.subr.bf16.mxu0 0
  %157 = vmatpush1.bf16.msra.mxu0 %v118
  %158 = vmatprep.subr.bf16.mxu0 0
  %159 = vmatpush1.bf16.msra.mxu0 %v119
  %160 = vmatprep.subr.bf16.mxu0 0
  %161 = vmatpush1.bf16.msra.mxu0 %v120
  %162 = vmatprep.subr.bf16.mxu0 0
  %163 = vmatpush1.bf16.msra.mxu0 %v121
  %164 = vmatprep.subr.bf16.mxu0 0
  %165 = vmatpush1.bf16.msra.mxu0 %v122
  %166 = vmatprep.subr.bf16.mxu0 0
  %167 = vmatpush1.bf16.msra.mxu0 %v123
  %168 = vmatprep.subr.bf16.mxu0 0
  %169 = vmatpush1.bf16.msra.mxu0 %v124
  %170 = vmatprep.subr.bf16.mxu0 0
  %171 = vmatpush1.bf16.msra.mxu0 %v144
  %172 = vmatprep.subr.bf16.mxu0 0
  %173 = vmatpush1.bf16.msra.mxu0 0
  %174 = vmatprep.subr.bf16.mxu0 0
  %175 = vmatpush1.bf16.msra.mxu0 0
  %176 = vmatprep.subr.bf16.mxu0 0
  %177 = vmatpush1.bf16.msra.mxu0 0
  %178 = vmatprep.mubr.bf16.mxu0 %v140
  %179 = vmatmul.mubr.bf16.gmra.mrb[0].mxu0 %v60
  %v180 = vpop.f32.mrb[0].mxu0
  %v181 = vadd.f32 %v47, %v180
  %v182 = vpop.f32.mrb[0].mxu0
  %v183 = vpop.f32.mrb[0].mxu0
  %v184 = vadd.f32 %v52, %v183
  %v185 = vpop.f32.mrb[0].mxu0
  %186 = vdwg.mxu0
  %v187 = vmax.f32 %v181, 0.0
  %v188 = vmax.f32 %v184, 0.0
  %189 = vst [vmem:[%s3] sm:$0xff] %v187
  %190 = vst [vmem:[%s3 + $0x8] sm:$0xff] %v188
  // Predicated region
  $region14: #{net_forward.9} parent=0 // pred_check
    _
  $region15: #{net_forward.9} parent=0 // pred_check_branch
    %192 = sbr.rel (0) target = $region17
  $region16: #{net_forward.9} parent=0 // pred_region
    _
  $region17: #{net_forward.9} parent=0 // pred_fallthru
    _
  // Predicated region
  $region18: #{net_forward.9} parent=0 // pred_check
    _
  $region19: #{net_forward.9} parent=0 // pred_check_branch
    %194 = sbr.rel (0) target = $region21
  $region20: #{net_forward.9} parent=0 // pred_region
    _
  $region21: #{net_forward.9} parent=0 // pred_fallthru
    _

// kernel: net_forward.11
$region0: #{net_forward.11}
  #allocation0 [shape = 'u32[]', space=smem, size = 0x4, offset = 0x4, fixed_abs, tag = 'smem constant byte address 0x4 - core index']
  #allocation1 [shape = 'u32[144,128]{1,0:T(1,128)}', space=vmem, size = 0x12000, scoped, tag = 'internal scratch']
  %s0 = inlined_call_operand.vmem [shape: f32[16,128], index: 0, kind: input, shape index: {}]
  %s1 = inlined_call_operand.vmem [shape: f32[16,128], index: 1, kind: input, shape index: {}]
  %s2 = inlined_call_operand.hbm [shape: f32[1,1], index: 2, kind: output, shape index: {}]
  %s3 = sld [smem:[#allocation0]]
  $region22: #{net_forward.11} parent=0
    _
  %s5 = ssub.s32 1, %s3
  %s6 = scalar_select 0, %s5, %s3
  $region1: #{net_forward.11} parent=0
    #allocation2 [shape = 'u8[512]{0}', space=vmem, size = 0x400, scoped, tag = 'output window, operand 0, single buffered']
    #allocation3 [shape = 's32[1]{0}', space=sflag, size = 0x4, scoped, tag = 'scoped memory for net_forward.11']
    %7 = vsyncpa [#allocation3], 0
    // Predicated region
    $region2: #{net_forward.11} parent=1 // pred_check
      _
    $region3: #{net_forward.11} parent=1 // pred_check_branch
      %9 = sbr.rel (0) target = $region5
    $region4: #{net_forward.11} parent=1 // pred_region
      _
    $region5: #{net_forward.11} parent=1 // pred_fallthru
      _
    // Predicated region
    $region6: #{net_forward.11} parent=1 // pred_check
      _
    $region7: #{net_forward.11} parent=1 // pred_check_branch
      %11 = sbr.rel (0) target = $region9
    $region8: #{net_forward.11} parent=1 // pred_region
      _
    $region9: #{net_forward.11} parent=1 // pred_fallthru
      _
    %p12 = scmp.eq.s32.totalorder 0, 0
    // Predicated region
    $region10: #{net_forward.11} parent=1 // pred_check
      %p13 = pneg %p12
    $region11: #{net_forward.11} parent=1 // pred_check_branch
      %15 = sbr.rel (%p13) target = $region13
    $region12: #{net_forward.11} parent=1 // pred_region
      %vm16 = vcmask 0
      %17 = vst.msk [vmem:[#allocation2] sm:$0x1] %vm16, 0.0
    $region13: #{net_forward.11} parent=1 // pred_fallthru
      _
    %v18 = vld [vmem:[%s0] sm:$0xff]
    %v19 = vld [vmem:[%s0 + $0x8] sm:$0xff]
    %v20 = vld [vmem:[%s1] sm:$0xff]
    %v21 = vld [vmem:[%s1 + $0x8] sm:$0xff]
    %v22 = vsub.f32 %v18, %v20
    %v23 = vsub.f32 %v19, %v21
    %v24 = vld [vmem:[#allocation2] sm:$0x1]
    %v25 = vmul.f32 %v22, %v22
    %v26 = vmul.f32 %v23, %v23
    %v27 = vadd.f32 %v25, %v26
    %28 = vadd.xlane.f32.xlu0 %v27
    %v29 = vpop.xlane.xlu0 %28
    %v30 = vrot.slane %v29, 4
    %v31 = vadd.f32 %v29, %v30
    %v32 = vrot.slane %v31, 2
    %v33 = vadd.f32 %v31, %v32
    %v34 = vrot.slane %v33, 1
    %v35 = vadd.f32 %v33, %v34
    %s36 = vtos %v35
    %s37 = smul.f32 %s36, 0.0006510417
    %v38 = vstv %s37
    %v39 = vadd.f32 %v24, %v38
    %vm40 = vcmask 0
    %41 = vst.msk [vmem:[#allocation2] sm:$0x1] %vm40, %v39
    // Predicated region
    $region14: #{net_forward.11} parent=1 // pred_check
      _
    $region15: #{net_forward.11} parent=1 // pred_check_branch
      %43 = sbr.rel (0) target = $region17
    $region16: #{net_forward.11} parent=1 // pred_region
      %s45 = ssub.s32 16, 16
      %46 = vsyncadd [#allocation3], %s45
      %s48 = sshll.u32 [#allocation2], 4
      %s49 = int_to_ptr.vmem [resolvable:$true] %s48
      %51 = dma.vmem_to_hbm [thread:$0]  %s49, 16, %s2, [#allocation3]
    $region17: #{net_forward.11} parent=1 // pred_fallthru
      _
    // Predicated region
    $region18: #{net_forward.11} parent=1 // pred_check
      _
    $region19: #{net_forward.11} parent=1 // pred_check_branch
      %53 = sbr.rel (0) target = $region21
    $region20: #{net_forward.11} parent=1 // pred_region
      %54 = dma.done [#allocation3], 16
    $region21: #{net_forward.11} parent=1 // pred_fallthru
      _
    %55 = vsyncpa [#allocation3], 1

// kernel: net_forward.10
$region0: #{net_forward.10}
  #allocation0 [shape = 'u32[]', space=smem, size = 0x4, offset = 0x4, fixed_abs, tag = 'smem constant byte address 0x4 - core index']
  #allocation1 [shape = 'u32[144,128]{1,0:T(1,128)}', space=vmem, size = 0x12000, scoped, tag = 'internal scratch']
  %s0 = inlined_call_operand.vmem [shape: bf16[8,400], index: 0, kind: input, shape index: {}]
  %s1 = inlined_call_operand.vmem [shape: bf16[400,512], index: 1, kind: input, shape index: {}]
  %s2 = inlined_call_operand.vmem [shape: f32[8,1], index: 2, kind: input, shape index: {}]
  %s3 = inlined_call_operand.vmem [shape: f32[8,512], index: 3, kind: output, shape index: {}]
  %s4 = sld [smem:[#allocation0]]
  $region22: #{net_forward.10} parent=0
    _
  %s6 = ssub.s32 1, %s4
  %s7 = scalar_select 0, %s6, %s4
  // Predicated region
  $region2: #{net_forward.10} parent=0 // pred_check
    _
  $region3: #{net_forward.10} parent=0 // pred_check_branch
    %9 = sbr.rel (0) target = $region5
  $region4: #{net_forward.10} parent=0 // pred_region
    _
  $region5: #{net_forward.10} parent=0 // pred_fallthru
    _
  // Predicated region
  $region6: #{net_forward.10} parent=0 // pred_check
    _
  $region7: #{net_forward.10} parent=0 // pred_check_branch
    %11 = sbr.rel (0) target = $region9
  $region8: #{net_forward.10} parent=0 // pred_region
    _
  $region9: #{net_forward.10} parent=0 // pred_fallthru
    _
  // Predicated region
  $region10: #{net_forward.10} parent=0 // pred_check
    _
  $region11: #{net_forward.10} parent=0 // pred_check_branch
    %13 = sbr.rel (0) target = $region13
  $region12: #{net_forward.10} parent=0 // pred_region
    _
  $region13: #{net_forward.10} parent=0 // pred_fallthru
    _
  %v15 = vld [vmem:[%s0] sm:$0xff]
  %v16 = vld [vmem:[%s0 + $0x8] sm:$0xff]
  %v17 = vld [vmem:[%s1] sm:$0xff]
  %v18 = vld [vmem:[%s1 + $0x8] sm:$0xff]
  %v19 = vld [vmem:[%s1 + $0x10] sm:$0xff]
  %v20 = vld [vmem:[%s1 + $0x18] sm:$0xff]
  %v21 = vld [vmem:[%s1 + $0x20] sm:$0xff]
  %v22 = vld [vmem:[%s1 + $0x28] sm:$0xff]
  %v23 = vld [vmem:[%s1 + $0x30] sm:$0xff]
  %v24 = vld [vmem:[%s1 + $0x38] sm:$0xff]
  %v25 = vld [vmem:[%s1 + $0x40] sm:$0xff]
  %v26 = vld [vmem:[%s1 + $0x48] sm:$0xff]
  %v27 = vld [vmem:[%s1 + $0x50] sm:$0xff]
  %v28 = vld [vmem:[%s1 + $0x58] sm:$0xff]
  %v29 = vld [vmem:[%s1 + $0x60] sm:$0xff]
  %v30 = vld [vmem:[%s1 + $0x68] sm:$0xff]
  %v31 = vld [vmem:[%s1 + $0x70] sm:$0xff]
  %v32 = vld [vmem:[%s1 + $0x78] sm:$0xff]
  %v33 = vld [vmem:[%s1 + $0x80] sm:$0xff]
  %v34 = vld [vmem:[%s1 + $0x88] sm:$0xff]
  %v35 = vld [vmem:[%s1 + $0x90] sm:$0xff]
  %v36 = vld [vmem:[%s1 + $0x98] sm:$0xff]
  %v37 = vld [vmem:[%s1 + $0xa0] sm:$0xff]
  %v38 = vld [vmem:[%s1 + $0xa8] sm:$0xff]
  %v39 = vld [vmem:[%s1 + $0xb0] sm:$0xff]
  %v40 = vld [vmem:[%s1 + $0xb8] sm:$0xff]
  %v41 = vld [vmem:[%s1 + $0xc0] sm:$0xff]
  %v42 = vld [vmem:[%s1 + $0xc8] sm:$0xff]
  %v43 = vld [vmem:[%s1 + $0xd0] sm:$0xff]
  %v44 = vld [vmem:[%s1 + $0xd8] sm:$0xff]
  %v45 = vld [vmem:[%s1 + $0xe0] sm:$0xff]
  %v46 = vld [vmem:[%s1 + $0xe8] sm:$0xff]
  %v47 = vld [vmem:[%s1 + $0xf0] sm:$0xff]
  %v48 = vld [vmem:[%s1 + $0xf8] sm:$0xff]
  %v49 = vld [vmem:[%s1 + $0x100] sm:$0xff]
  %v50 = vld [vmem:[%s1 + $0x108] sm:$0xff]
  %v51 = vld [vmem:[%s1 + $0x110] sm:$0xff]
  %v52 = vld [vmem:[%s1 + $0x118] sm:$0xff]
  %v53 = vld [vmem:[%s1 + $0x120] sm:$0xff]
  %v54 = vld [vmem:[%s1 + $0x128] sm:$0xff]
  %v55 = vld [vmem:[%s1 + $0x130] sm:$0xff]
  %v56 = vld [vmem:[%s1 + $0x138] sm:$0xff]
  %v57 = vld [vmem:[%s1 + $0x140] sm:$0xff]
  %v58 = vld [vmem:[%s1 + $0x148] sm:$0xff]
  %v59 = vld [vmem:[%s1 + $0x150] sm:$0xff]
  %v60 = vld [vmem:[%s1 + $0x158] sm:$0xff]
  %v61 = vld [vmem:[%s1 + $0x160] sm:$0xff]
  %v62 = vld [vmem:[%s1 + $0x168] sm:$0xff]
  %v63 = vld [vmem:[%s1 + $0x170] sm:$0xff]
  %v64 = vld [vmem:[%s1 + $0x178] sm:$0xff]
  %v65 = vld [vmem:[%s1 + $0x180] sm:$0xff]
  %v66 = vld [vmem:[%s1 + $0x188] sm:$0xff]
  %v67 = vld [vmem:[%s1 + $0x190] sm:$0xff]
  %v68 = vld [vmem:[%s1 + $0x198] sm:$0xff]
  %v69 = vld [vmem:[%s1 + $0x1a0] sm:$0xff]
  %v70 = vld [vmem:[%s1 + $0x1a8] sm:$0xff]
  %v71 = vld [vmem:[%s1 + $0x1b0] sm:$0xff]
  %v72 = vld [vmem:[%s1 + $0x1b8] sm:$0xff]
  %v73 = vld [vmem:[%s1 + $0x1c0] sm:$0xff]
  %v74 = vld [vmem:[%s1 + $0x1c8] sm:$0xff]
  %v75 = vld [vmem:[%s1 + $0x1d0] sm:$0xff]
  %v76 = vld [vmem:[%s1 + $0x1d8] sm:$0xff]
  %v77 = vld [vmem:[%s1 + $0x1e0] sm:$0xff]
  %v78 = vld [vmem:[%s1 + $0x1e8] sm:$0xff]
  %v79 = vld [vmem:[%s1 + $0x1f0] sm:$0xff]
  %v80 = vld [vmem:[%s1 + $0x1f8] sm:$0xff]
  %v81 = vld [vmem:[%s1 + $0x200] sm:$0xff]
  %v82 = vld [vmem:[%s1 + $0x208] sm:$0xff]
  %v83 = vld [vmem:[%s1 + $0x210] sm:$0xff]
  %v84 = vld [vmem:[%s1 + $0x218] sm:$0xff]
  %v85 = vld [vmem:[%s1 + $0x220] sm:$0xff]
  %v86 = vld [vmem:[%s1 + $0x228] sm:$0xff]
  %v87 = vld [vmem:[%s1 + $0x230] sm:$0xff]
  %v88 = vld [vmem:[%s1 + $0x238] sm:$0xff]
  %v89 = vld [vmem:[%s1 + $0x240] sm:$0xff]
  %v90 = vld [vmem:[%s1 + $0x248] sm:$0xff]
  %v91 = vld [vmem:[%s1 + $0x250] sm:$0xff]
  %v92 = vld [vmem:[%s1 + $0x258] sm:$0xff]
  %v93 = vld [vmem:[%s1 + $0x260] sm:$0xff]
  %v94 = vld [vmem:[%s1 + $0x268] sm:$0xff]
  %v95 = vld [vmem:[%s1 + $0x270] sm:$0xff]
  %v96 = vld [vmem:[%s1 + $0x278] sm:$0xff]
  %v97 = vld [vmem:[%s1 + $0x280] sm:$0xff]
  %v98 = vld [vmem:[%s1 + $0x288] sm:$0xff]
  %v99 = vld [vmem:[%s1 + $0x290] sm:$0xff]
  %v100 = vld [vmem:[%s1 + $0x298] sm:$0xff]
  %v101 = vld [vmem:[%s1 + $0x2a0] sm:$0xff]
  %v102 = vld [vmem:[%s1 + $0x2a8] sm:$0xff]
  %v103 = vld [vmem:[%s1 + $0x2b0] sm:$0xff]
  %v104 = vld [vmem:[%s1 + $0x2b8] sm:$0xff]
  %v105 = vld [vmem:[%s1 + $0x2c0] sm:$0xff]
  %v106 = vld [vmem:[%s1 + $0x2c8] sm:$0xff]
  %v107 = vld [vmem:[%s1 + $0x2d0] sm:$0xff]
  %v108 = vld [vmem:[%s1 + $0x2d8] sm:$0xff]
  %v109 = vld [vmem:[%s1 + $0x2e0] sm:$0xff]
  %v110 = vld [vmem:[%s1 + $0x2e8] sm:$0xff]
  %v111 = vld [vmem:[%s1 + $0x2f0] sm:$0xff]
  %v112 = vld [vmem:[%s1 + $0x2f8] sm:$0xff]
  %v113 = vld [vmem:[%s1 + $0x300] sm:$0xff]
  %v114 = vld [vmem:[%s1 + $0x308] sm:$0xff]
  %v115 = vld [vmem:[%s1 + $0x310] sm:$0xff]
  %v116 = vld [vmem:[%s1 + $0x318] sm:$0xff]
  %v117 = vld [vmem:[%s2] sm:$0xff]
  %119 = vset.pattern.permute.xlu0 0
  %120 = vperm.xlu0 %119, %v117
  %v121 = vpop.permute.xlu0 %120
  %v125 = vunpack.c.l.b16 %v15
  %v126 = vunpack.c.h.b16 %v15
  %v127 = vunpack.c.l.b16 %v16
  %v128 = vunpack.c.h.b16 %v16
  %v129 = vpack.c.b16 %v125, %v125
  %v130 = vpack.c.b16 %v126, %v126
  %v131 = vpack.c.b16 %v127, %v127
  %v132 = vpack.c.b16 %v128, %v128
  %v236 = vunpack.c.l.b16 %v17
  %v237 = vunpack.c.h.b16 %v17
  %v238 = vunpack.c.l.b16 %v18
  %v239 = vunpack.c.h.b16 %v18
  %v240 = vunpack.c.l.b16 %v19
  %v241 = vunpack.c.h.b16 %v19
  %v242 = vunpack.c.l.b16 %v20
  %v243 = vunpack.c.h.b16 %v20
  %v244 = vunpack.c.l.b16 %v21
  %v245 = vunpack.c.h.b16 %v21
  %v246 = vunpack.c.l.b16 %v22
  %v247 = vunpack.c.h.b16 %v22
  %v248 = vunpack.c.l.b16 %v23
  %v249 = vunpack.c.h.b16 %v23
  %v250 = vunpack.c.l.b16 %v24
  %v251 = vunpack.c.h.b16 %v24
  %v252 = vunpack.c.l.b16 %v25
  %v253 = vunpack.c.h.b16 %v25
  %v254 = vunpack.c.l.b16 %v26
  %v255 = vunpack.c.h.b16 %v26
  %v256 = vunpack.c.l.b16 %v27
  %v257 = vunpack.c.h.b16 %v27
  %v258 = vunpack.c.l.b16 %v28
  %v259 = vunpack.c.h.b16 %v28
  %v260 = vunpack.c.l.b16 %v29
  %v261 = vunpack.c.h.b16 %v29
  %v262 = vunpack.c.l.b16 %v30
  %v263 = vunpack.c.h.b16 %v30
  %v264 = vunpack.c.l.b16 %v31
  %v265 = vunpack.c.h.b16 %v31
  %v266 = vunpack.c.l.b16 %v32
  %v267 = vunpack.c.h.b16 %v32
  %v268 = vunpack.c.l.b16 %v33
  %v269 = vunpack.c.h.b16 %v33
  %v270 = vunpack.c.l.b16 %v34
  %v271 = vunpack.c.h.b16 %v34
  %v272 = vunpack.c.l.b16 %v35
  %v273 = vunpack.c.h.b16 %v35
  %v274 = vunpack.c.l.b16 %v36
  %v275 = vunpack.c.h.b16 %v36
  %v276 = vunpack.c.l.b16 %v37
  %v277 = vunpack.c.h.b16 %v37
  %v278 = vunpack.c.l.b16 %v38
  %v279 = vunpack.c.h.b16 %v38
  %v280 = vunpack.c.l.b16 %v39
  %v281 = vunpack.c.h.b16 %v39
  %v282 = vunpack.c.l.b16 %v40
  %v283 = vunpack.c.h.b16 %v40
  %v284 = vunpack.c.l.b16 %v41
  %v285 = vunpack.c.h.b16 %v41
  %v286 = vunpack.c.l.b16 %v42
  %v287 = vunpack.c.h.b16 %v42
  %v288 = vunpack.c.l.b16 %v43
  %v289 = vunpack.c.h.b16 %v43
  %v290 = vunpack.c.l.b16 %v44
  %v291 = vunpack.c.h.b16 %v44
  %v292 = vunpack.c.l.b16 %v45
  %v293 = vunpack.c.h.b16 %v45
  %v294 = vunpack.c.l.b16 %v46
  %v295 = vunpack.c.h.b16 %v46
  %v296 = vunpack.c.l.b16 %v47
  %v297 = vunpack.c.h.b16 %v47
  %v298 = vunpack.c.l.b16 %v48
  %v299 = vunpack.c.h.b16 %v48
  %v300 = vunpack.c.l.b16 %v49
  %v301 = vunpack.c.h.b16 %v49
  %v302 = vunpack.c.l.b16 %v50
  %v303 = vunpack.c.h.b16 %v50
  %v304 = vunpack.c.l.b16 %v51
  %v305 = vunpack.c.h.b16 %v51
  %v306 = vunpack.c.l.b16 %v52
  %v307 = vunpack.c.h.b16 %v52
  %v308 = vunpack.c.l.b16 %v53
  %v309 = vunpack.c.h.b16 %v53
  %v310 = vunpack.c.l.b16 %v54
  %v311 = vunpack.c.h.b16 %v54
  %v312 = vunpack.c.l.b16 %v55
  %v313 = vunpack.c.h.b16 %v55
  %v314 = vunpack.c.l.b16 %v56
  %v315 = vunpack.c.h.b16 %v56
  %v316 = vunpack.c.l.b16 %v57
  %v317 = vunpack.c.h.b16 %v57
  %v318 = vunpack.c.l.b16 %v58
  %v319 = vunpack.c.h.b16 %v58
  %v320 = vunpack.c.l.b16 %v59
  %v321 = vunpack.c.h.b16 %v59
  %v322 = vunpack.c.l.b16 %v60
  %v323 = vunpack.c.h.b16 %v60
  %v324 = vunpack.c.l.b16 %v61
  %v325 = vunpack.c.h.b16 %v61
  %v326 = vunpack.c.l.b16 %v62
  %v327 = vunpack.c.h.b16 %v62
  %v328 = vunpack.c.l.b16 %v63
  %v329 = vunpack.c.h.b16 %v63
  %v330 = vunpack.c.l.b16 %v64
  %v331 = vunpack.c.h.b16 %v64
  %v332 = vunpack.c.l.b16 %v65
  %v333 = vunpack.c.h.b16 %v65
  %v334 = vunpack.c.l.b16 %v66
  %v335 = vunpack.c.h.b16 %v66
  %v336 = vunpack.c.l.b16 %v67
  %v337 = vunpack.c.h.b16 %v67
  %v338 = vunpack.c.l.b16 %v68
  %v339 = vunpack.c.h.b16 %v68
  %v340 = vunpack.c.l.b16 %v69
  %v341 = vunpack.c.h.b16 %v69
  %v342 = vunpack.c.l.b16 %v70
  %v343 = vunpack.c.h.b16 %v70
  %v344 = vunpack.c.l.b16 %v71
  %v345 = vunpack.c.h.b16 %v71
  %v346 = vunpack.c.l.b16 %v72
  %v347 = vunpack.c.h.b16 %v72
  %v348 = vunpack.c.l.b16 %v73
  %v349 = vunpack.c.h.b16 %v73
  %v350 = vunpack.c.l.b16 %v74
  %v351 = vunpack.c.h.b16 %v74
  %v352 = vunpack.c.l.b16 %v75
  %v353 = vunpack.c.h.b16 %v75
  %v354 = vunpack.c.l.b16 %v76
  %v355 = vunpack.c.h.b16 %v76
  %v356 = vunpack.c.l.b16 %v77
  %v357 = vunpack.c.h.b16 %v77
  %v358 = vunpack.c.l.b16 %v78
  %v359 = vunpack.c.h.b16 %v78
  %v360 = vunpack.c.l.b16 %v79
  %v361 = vunpack.c.h.b16 %v79
  %v362 = vunpack.c.l.b16 %v80
  %v363 = vunpack.c.h.b16 %v80
  %v364 = vunpack.c.l.b16 %v81
  %v365 = vunpack.c.h.b16 %v81
  %v366 = vunpack.c.l.b16 %v82
  %v367 = vunpack.c.h.b16 %v82
  %v368 = vunpack.c.l.b16 %v83
  %v369 = vunpack.c.h.b16 %v83
  %v370 = vunpack.c.l.b16 %v84
  %v371 = vunpack.c.h.b16 %v84
  %v372 = vunpack.c.l.b16 %v85
  %v373 = vunpack.c.h.b16 %v85
  %v374 = vunpack.c.l.b16 %v86
  %v375 = vunpack.c.h.b16 %v86
  %v376 = vunpack.c.l.b16 %v87
  %v377 = vunpack.c.h.b16 %v87
  %v378 = vunpack.c.l.b16 %v88
  %v379 = vunpack.c.h.b16 %v88
  %v380 = vunpack.c.l.b16 %v89
  %v381 = vunpack.c.h.b16 %v89
  %v382 = vunpack.c.l.b16 %v90
  %v383 = vunpack.c.h.b16 %v90
  %v384 = vunpack.c.l.b16 %v91
  %v385 = vunpack.c.h.b16 %v91
  %v386 = vunpack.c.l.b16 %v92
  %v387 = vunpack.c.h.b16 %v92
  %v388 = vunpack.c.l.b16 %v93
  %v389 = vunpack.c.h.b16 %v93
  %v390 = vunpack.c.l.b16 %v94
  %v391 = vunpack.c.h.b16 %v94
  %v392 = vunpack.c.l.b16 %v95
  %v393 = vunpack.c.h.b16 %v95
  %v394 = vunpack.c.l.b16 %v96
  %v395 = vunpack.c.h.b16 %v96
  %v396 = vunpack.c.l.b16 %v97
  %v397 = vunpack.c.h.b16 %v97
  %v398 = vunpack.c.l.b16 %v98
  %v399 = vunpack.c.h.b16 %v98
  %v400 = vunpack.c.l.b16 %v99
  %v401 = vunpack.c.h.b16 %v99
  %v402 = vunpack.c.l.b16 %v100
  %v403 = vunpack.c.h.b16 %v100
  %v404 = vunpack.c.l.b16 %v101
  %v405 = vunpack.c.h.b16 %v101
  %v406 = vunpack.c.l.b16 %v102
  %v407 = vunpack.c.h.b16 %v102
  %v408 = vunpack.c.l.b16 %v103
  %v409 = vunpack.c.h.b16 %v103
  %v410 = vunpack.c.l.b16 %v104
  %v411 = vunpack.c.h.b16 %v104
  %v412 = vunpack.c.l.b16 %v105
  %v413 = vunpack.c.h.b16 %v105
  %v414 = vunpack.c.l.b16 %v106
  %v415 = vunpack.c.h.b16 %v106
  %v416 = vunpack.c.l.b16 %v107
  %v417 = vunpack.c.h.b16 %v107
  %v418 = vunpack.c.l.b16 %v108
  %v419 = vunpack.c.h.b16 %v108
  %v420 = vunpack.c.l.b16 %v109
  %v421 = vunpack.c.h.b16 %v109
  %v422 = vunpack.c.l.b16 %v110
  %v423 = vunpack.c.h.b16 %v110
  %v424 = vunpack.c.l.b16 %v111
  %v425 = vunpack.c.h.b16 %v111
  %v426 = vunpack.c.l.b16 %v112
  %v427 = vunpack.c.h.b16 %v112
  %v428 = vunpack.c.l.b16 %v113
  %v429 = vunpack.c.h.b16 %v113
  %v430 = vunpack.c.l.b16 %v114
  %v431 = vunpack.c.h.b16 %v114
  %v432 = vunpack.c.l.b16 %v115
  %v433 = vunpack.c.h.b16 %v115
  %v434 = vunpack.c.l.b16 %v116
  %v435 = vunpack.c.h.b16 %v116
  %v436 = vpack.c.b16 %v240, %v236
  %v437 = vpack.c.b16 %v241, %v237
  %v438 = vpack.c.b16 %v242, %v238
  %v439 = vpack.c.b16 %v243, %v239
  %v440 = vpack.c.b16 %v248, %v244
  %v441 = vpack.c.b16 %v249, %v245
  %v442 = vpack.c.b16 %v250, %v246
  %v443 = vpack.c.b16 %v251, %v247
  %v444 = vpack.c.b16 %v256, %v252
  %v445 = vpack.c.b16 %v257, %v253
  %v446 = vpack.c.b16 %v258, %v254
  %v447 = vpack.c.b16 %v259, %v255
  %v448 = vpack.c.b16 %v264, %v260
  %v449 = vpack.c.b16 %v265, %v261
  %v450 = vpack.c.b16 %v266, %v262
  %v451 = vpack.c.b16 %v267, %v263
  %v452 = vpack.c.b16 %v272, %v268
  %v453 = vpack.c.b16 %v273, %v269
  %v454 = vpack.c.b16 %v274, %v270
  %v455 = vpack.c.b16 %v275, %v271
  %v456 = vpack.c.b16 %v280, %v276
  %v457 = vpack.c.b16 %v281, %v277
  %v458 = vpack.c.b16 %v282, %v278
  %v459 = vpack.c.b16 %v283, %v279
  %v460 = vpack.c.b16 %v288, %v284
  %v461 = vpack.c.b16 %v289, %v285
  %v462 = vpack.c.b16 %v290, %v286
  %v463 = vpack.c.b16 %v291, %v287
  %v464 = vpack.c.b16 %v296, %v292
  %v465 = vpack.c.b16 %v297, %v293
  %v466 = vpack.c.b16 %v298, %v294
  %v467 = vpack.c.b16 %v299, %v295
  %v468 = vpack.c.b16 %v304, %v300
  %v469 = vpack.c.b16 %v305, %v301
  %v470 = vpack.c.b16 %v306, %v302
  %v471 = vpack.c.b16 %v307, %v303
  %v472 = vpack.c.b16 %v312, %v308
  %v473 = vpack.c.b16 %v313, %v309
  %v474 = vpack.c.b16 %v314, %v310
  %v475 = vpack.c.b16 %v315, %v311
  %v476 = vpack.c.b16 %v320, %v316
  %v477 = vpack.c.b16 %v321, %v317
  %v478 = vpack.c.b16 %v322, %v318
  %v479 = vpack.c.b16 %v323, %v319
  %v480 = vpack.c.b16 %v328, %v324
  %v481 = vpack.c.b16 %v329, %v325
  %v482 = vpack.c.b16 %v330, %v326
  %v483 = vpack.c.b16 %v331, %v327
  %v484 = vpack.c.b16 %v336, %v332
  %v485 = vpack.c.b16 %v337, %v333
  %v486 = vpack.c.b16 %v338, %v334
  %v487 = vpack.c.b16 %v339, %v335
  %v488 = vpack.c.b16 %v344, %v340
  %v489 = vpack.c.b16 %v345, %v341
  %v490 = vpack.c.b16 %v346, %v342
  %v491 = vpack.c.b16 %v347, %v343
  %v492 = vpack.c.b16 %v352, %v348
  %v493 = vpack.c.b16 %v353, %v349
  %v494 = vpack.c.b16 %v354, %v350
  %v495 = vpack.c.b16 %v355, %v351
  %v496 = vpack.c.b16 %v360, %v356
  %v497 = vpack.c.b16 %v361, %v357
  %v498 = vpack.c.b16 %v362, %v358
  %v499 = vpack.c.b16 %v363, %v359
  %v500 = vpack.c.b16 %v368, %v364
  %v501 = vpack.c.b16 %v369, %v365
  %v502 = vpack.c.b16 %v370, %v366
  %v503 = vpack.c.b16 %v371, %v367
  %v504 = vpack.c.b16 %v376, %v372
  %v505 = vpack.c.b16 %v377, %v373
  %v506 = vpack.c.b16 %v378, %v374
  %v507 = vpack.c.b16 %v379, %v375
  %v508 = vpack.c.b16 %v384, %v380
  %v509 = vpack.c.b16 %v385, %v381
  %v510 = vpack.c.b16 %v386, %v382
  %v511 = vpack.c.b16 %v387, %v383
  %v512 = vpack.c.b16 %v392, %v388
  %v513 = vpack.c.b16 %v393, %v389
  %v514 = vpack.c.b16 %v394, %v390
  %v515 = vpack.c.b16 %v395, %v391
  %v516 = vpack.c.b16 %v400, %v396
  %v517 = vpack.c.b16 %v401, %v397
  %v518 = vpack.c.b16 %v402, %v398
  %v519 = vpack.c.b16 %v403, %v399
  %v520 = vpack.c.b16 %v408, %v404
  %v521 = vpack.c.b16 %v409, %v405
  %v522 = vpack.c.b16 %v410, %v406
  %v523 = vpack.c.b16 %v411, %v407
  %v524 = vpack.c.b16 %v416, %v412
  %v525 = vpack.c.b16 %v417, %v413
  %v526 = vpack.c.b16 %v418, %v414
  %v527 = vpack.c.b16 %v419, %v415
  %v528 = vpack.c.b16 %v424, %v420
  %v529 = vpack.c.b16 %v425, %v421
  %v530 = vpack.c.b16 %v426, %v422
  %v531 = vpack.c.b16 %v427, %v423
  %v532 = vpack.c.b16 %v432, %v428
  %v533 = vpack.c.b16 %v433, %v429
  %v534 = vpack.c.b16 %v434, %v430
  %v535 = vpack.c.b16 %v435, %v431
  %vm636 = vcmask 130048
  %v638 = vsel %vm636, %v132, 0
  %640 = vmatprep.subr.bf16.mxu0 %v437
  %641 = vmatpush1.bf16.msra.mxu0 %v436
  %642 = vmatprep.subr.bf16.mxu0 %v441
  %643 = vmatpush1.bf16.msra.mxu0 %v440
  %644 = vmatprep.subr.bf16.mxu0 %v445
  %645 = vmatpush1.bf16.msra.mxu0 %v444
  %646 = vmatprep.subr.bf16.mxu0 %v449
  %647 = vmatpush1.bf16.msra.mxu0 %v448
  %648 = vmatprep.subr.bf16.mxu0 %v453
  %649 = vmatpush1.bf16.msra.mxu0 %v452
  %650 = vmatprep.subr.bf16.mxu0 %v457
  %651 = vmatpush1.bf16.msra.mxu0 %v456
  %652 = vmatprep.subr.bf16.mxu0 %v461
  %653 = vmatpush1.bf16.msra.mxu0 %v460
  %654 = vmatprep.subr.bf16.mxu0 %v465
  %655 = vmatpush1.bf16.msra.mxu0 %v464
  %656 = vmatprep.subr.bf16.mxu0 %v469
  %657 = vmatpush1.bf16.msra.mxu0 %v468
  %658 = vmatprep.subr.bf16.mxu0 %v473
  %659 = vmatpush1.bf16.msra.mxu0 %v472
  %660 = vmatprep.subr.bf16.mxu0 %v477
  %661 = vmatpush1.bf16.msra.mxu0 %v476
  %662 = vmatprep.subr.bf16.mxu0 %v481
  %663 = vmatpush1.bf16.msra.mxu0 %v480
  %664 = vmatprep.subr.bf16.mxu0 %v485
  %665 = vmatpush1.bf16.msra.mxu0 %v484
  %666 = vmatprep.subr.bf16.mxu0 %v489
  %667 = vmatpush1.bf16.msra.mxu0 %v488
  %668 = vmatprep.subr.bf16.mxu0 %v493
  %669 = vmatpush1.bf16.msra.mxu0 %v492
  %670 = vmatprep.subr.bf16.mxu0 %v497
  %671 = vmatpush1.bf16.msra.mxu0 %v496
  %672 = vmatprep.mubr.bf16.mxu0 %v130
  %673 = vmatmul.mubr.bf16.gmra.mrb[0].mxu0 %v129
  %v674 = vpop.f32.mrb[0].mxu0
  %v675 = vadd.f32 %v121, %v674
  %v676 = vpop.f32.mrb[0].mxu0
  %v677 = vadd.f32 %v121, %v676
  %v678 = vpop.f32.mrb[0].mxu0
  %v679 = vpop.f32.mrb[0].mxu0
  %680 = vdwg.mxu0
  %681 = vmatprep.subr.bf16.mxu0 %v501
  %682 = vmatpush1.bf16.msra.mxu0 %v500
  %683 = vmatprep.subr.bf16.mxu0 %v505
  %684 = vmatpush1.bf16.msra.mxu0 %v504
  %685 = vmatprep.subr.bf16.mxu0 %v509
  %686 = vmatpush1.bf16.msra.mxu0 %v508
  %687 = vmatprep.subr.bf16.mxu0 %v513
  %688 = vmatpush1.bf16.msra.mxu0 %v512
  %689 = vmatprep.subr.bf16.mxu0 %v517
  %690 = vmatpush1.bf16.msra.mxu0 %v516
  %691 = vmatprep.subr.bf16.mxu0 %v521
  %692 = vmatpush1.bf16.msra.mxu0 %v520
  %693 = vmatprep.subr.bf16.mxu0 %v525
  %694 = vmatpush1.bf16.msra.mxu0 %v524
  %695 = vmatprep.subr.bf16.mxu0 %v529
  %696 = vmatpush1.bf16.msra.mxu0 %v528
  %697 = vmatprep.subr.bf16.mxu0 %v533
  %698 = vmatpush1.bf16.msra.mxu0 %v532
  %699 = vmatprep.subr.bf16.mxu0 0
  %700 = vmatpush1.bf16.msra.mxu0 0
  %701 = vmatprep.subr.bf16.mxu0 0
  %702 = vmatpush1.bf16.msra.mxu0 0
  %703 = vmatprep.subr.bf16.mxu0 0
  %704 = vmatpush1.bf16.msra.mxu0 0
  %705 = vmatprep.subr.bf16.mxu0 0
  %706 = vmatpush1.bf16.msra.mxu0 0
  %707 = vmatprep.subr.bf16.mxu0 0
  %708 = vmatpush1.bf16.msra.mxu0 0
  %709 = vmatprep.subr.bf16.mxu0 0
  %710 = vmatpush1.bf16.msra.mxu0 0
  %711 = vmatprep.subr.bf16.mxu0 0
  %712 = vmatpush1.bf16.msra.mxu0 0
  %713 = vmatprep.mubr.bf16.mxu0 %v638
  %714 = vmatmul.mubr.bf16.gmra.mrb[0].mxu0 %v131
  %v715 = vpop.f32.mrb[0].mxu0
  %v716 = vadd.f32 %v675, %v715
  %v717 = vpop.f32.mrb[0].mxu0
  %v718 = vadd.f32 %v677, %v717
  %v719 = vpop.f32.mrb[0].mxu0
  %v720 = vpop.f32.mrb[0].mxu0
  %721 = vdwg.mxu0
  %722 = vmatprep.subr.bf16.mxu0 %v439
  %723 = vmatpush1.bf16.msra.mxu0 %v438
  %724 = vmatprep.subr.bf16.mxu0 %v443
  %725 = vmatpush1.bf16.msra.mxu0 %v442
  %726 = vmatprep.subr.bf16.mxu0 %v447
  %727 = vmatpush1.bf16.msra.mxu0 %v446
  %728 = vmatprep.subr.bf16.mxu0 %v451
  %729 = vmatpush1.bf16.msra.mxu0 %v450
  %730 = vmatprep.subr.bf16.mxu0 %v455
  %731 = vmatpush1.bf16.msra.mxu0 %v454
  %732 = vmatprep.subr.bf16.mxu0 %v459
  %733 = vmatpush1.bf16.msra.mxu0 %v458
  %734 = vmatprep.subr.bf16.mxu0 %v463
  %735 = vmatpush1.bf16.msra.mxu0 %v462
  %736 = vmatprep.subr.bf16.mxu0 %v467
  %737 = vmatpush1.bf16.msra.mxu0 %v466
  %738 = vmatprep.subr.bf16.mxu0 %v471
  %739 = vmatpush1.bf16.msra.mxu0 %v470
  %740 = vmatprep.subr.bf16.mxu0 %v475
  %741 = vmatpush1.bf16.msra.mxu0 %v474
  %742 = vmatprep.subr.bf16.mxu0 %v479
  %743 = vmatpush1.bf16.msra.mxu0 %v478
  %744 = vmatprep.subr.bf16.mxu0 %v483
  %745 = vmatpush1.bf16.msra.mxu0 %v482
  %746 = vmatprep.subr.bf16.mxu0 %v487
  %747 = vmatpush1.bf16.msra.mxu0 %v486
  %748 = vmatprep.subr.bf16.mxu0 %v491
  %749 = vmatpush1.bf16.msra.mxu0 %v490
  %750 = vmatprep.subr.bf16.mxu0 %v495
  %751 = vmatpush1.bf16.msra.mxu0 %v494
  %752 = vmatprep.subr.bf16.mxu0 %v499
  %753 = vmatpush1.bf16.msra.mxu0 %v498
  %754 = vmatprep.mubr.bf16.mxu0 %v130
  %755 = vmatmul.mubr.bf16.gmra.mrb[0].mxu0 %v129
  %v756 = vpop.f32.mrb[0].mxu0
  %v757 = vadd.f32 %v121, %v756
  %v758 = vpop.f32.mrb[0].mxu0
  %v759 = vadd.f32 %v121, %v758
  %v760 = vpop.f32.mrb[0].mxu0
  %v761 = vpop.f32.mrb[0].mxu0
  %762 = vdwg.mxu0
  %763 = vmatprep.subr.bf16.mxu0 %v503
  %764 = vmatpush1.bf16.msra.mxu0 %v502
  %765 = vmatprep.subr.bf16.mxu0 %v507
  %766 = vmatpush1.bf16.msra.mxu0 %v506
  %767 = vmatprep.subr.bf16.mxu0 %v511
  %768 = vmatpush1.bf16.msra.mxu0 %v510
  %769 = vmatprep.subr.bf16.mxu0 %v515
  %770 = vmatpush1.bf16.msra.mxu0 %v514
  %771 = vmatprep.subr.bf16.mxu0 %v519
  %772 = vmatpush1.bf16.msra.mxu0 %v518
  %773 = vmatprep.subr.bf16.mxu0 %v523
  %774 = vmatpush1.bf16.msra.mxu0 %v522
  %775 = vmatprep.subr.bf16.mxu0 %v527
  %776 = vmatpush1.bf16.msra.mxu0 %v526
  %777 = vmatprep.subr.bf16.mxu0 %v531
  %778 = vmatpush1.bf16.msra.mxu0 %v530
  %779 = vmatprep.subr.bf16.mxu0 %v535
  %780 = vmatpush1.bf16.msra.mxu0 %v534
  %781 = vmatprep.subr.bf16.mxu0 0
  %782 = vmatpush1.bf16.msra.mxu0 0
  %783 = vmatprep.subr.bf16.mxu0 0
  %784 = vmatpush1.bf16.msra.mxu0 0
  %785 = vmatprep.subr.bf16.mxu0 0
  %786 = vmatpush1.bf16.msra.mxu0 0
  %787 = vmatprep.subr.bf16.mxu0 0
  %788 = vmatpush1.bf16.msra.mxu0 0
  %789 = vmatprep.subr.bf16.mxu0 0
  %790 = vmatpush1.bf16.msra.mxu0 0
  %791 = vmatprep.subr.bf16.mxu0 0
  %792 = vmatpush1.bf16.msra.mxu0 0
  %793 = vmatprep.subr.bf16.mxu0 0
  %794 = vmatpush1.bf16.msra.mxu0 0
  %795 = vmatprep.mubr.bf16.mxu0 %v638
  %796 = vmatmul.mubr.bf16.gmra.mrb[0].mxu0 %v131
  %v797 = vpop.f32.mrb[0].mxu0
  %v798 = vadd.f32 %v757, %v797
  %v799 = vpop.f32.mrb[0].mxu0
  %v800 = vadd.f32 %v759, %v799
  %v801 = vpop.f32.mrb[0].mxu0
  %v802 = vpop.f32.mrb[0].mxu0
  %803 = vdwg.mxu0
  %804 = vst [vmem:[%s3] sm:$0xff] %v716
  %805 = vst [vmem:[%s3 + $0x8] sm:$0xff] %v718
  %806 = vst [vmem:[%s3 + $0x10] sm:$0xff] %v798
  %807 = vst [vmem:[%s3 + $0x18] sm:$0xff] %v800
  // Predicated region
  $region14: #{net_forward.10} parent=0 // pred_check
    _
  $region15: #{net_forward.10} parent=0 // pred_check_branch
    %809 = sbr.rel (0) target = $region17
  $region16: #{net_forward.10} parent=0 // pred_region
    _
  $region17: #{net_forward.10} parent=0 // pred_fallthru
    _
  // Predicated region
  $region18: #{net_forward.10} parent=0 // pred_check
    _
  $region19: #{net_forward.10} parent=0 // pred_check_branch
    %811 = sbr.rel (0) target = $region21
  $region20: #{net_forward.10} parent=0 // pred_region
    _
  $region21: #{net_forward.10} parent=0 // pred_fallthru
    _

// kernel: net_forward.8
$region0: #{net_forward.8}
  #allocation0 [shape = 'u32[]', space=smem, size = 0x4, offset = 0x4, fixed_abs, tag = 'smem constant byte address 0x4 - core index']
  #allocation1 [shape = 'u32[144,128]{1,0:T(1,128)}', space=vmem, size = 0x12000, scoped, tag = 'internal scratch']
  %s0 = inlined_call_operand.vmem [shape: f32[8,32], index: 0, kind: input, shape index: {}]
  %s1 = inlined_call_operand.vmem [shape: f32[8,1], index: 1, kind: input, shape index: {}]
  %s2 = inlined_call_operand.vmem [shape: f32[8,1], index: 2, kind: input, shape index: {}]
  %s3 = inlined_call_operand.hbm [shape: f32[1,1], index: 3, kind: output, shape index: {}]
  %s4 = sld [smem:[#allocation0]]
  $region22: #{net_forward.8} parent=0
    _
  %s6 = ssub.s32 1, %s4
  %s7 = scalar_select 0, %s6, %s4
  $region1: #{net_forward.8} parent=0
    #allocation2 [shape = 'u8[512]{0}', space=vmem, size = 0x400, scoped, tag = 'output window, operand 0, single buffered']
    #allocation3 [shape = 's32[1]{0}', space=sflag, size = 0x4, scoped, tag = 'scoped memory for net_forward.8']
    %8 = vsyncpa [#allocation3], 0
    // Predicated region
    $region2: #{net_forward.8} parent=1 // pred_check
      _
    $region3: #{net_forward.8} parent=1 // pred_check_branch
      %10 = sbr.rel (0) target = $region5
    $region4: #{net_forward.8} parent=1 // pred_region
      _
    $region5: #{net_forward.8} parent=1 // pred_fallthru
      _
    // Predicated region
    $region6: #{net_forward.8} parent=1 // pred_check
      _
    $region7: #{net_forward.8} parent=1 // pred_check_branch
      %12 = sbr.rel (0) target = $region9
    $region8: #{net_forward.8} parent=1 // pred_region
      _
    $region9: #{net_forward.8} parent=1 // pred_fallthru
      _
    // Predicated region
    $region10: #{net_forward.8} parent=1 // pred_check
      _
    $region11: #{net_forward.8} parent=1 // pred_check_branch
      %14 = sbr.rel (0) target = $region13
    $region12: #{net_forward.8} parent=1 // pred_region
      _
    $region13: #{net_forward.8} parent=1 // pred_fallthru
      _
    %v15 = vld [vmem:[%s0] sm:$0xff]
    %v16 = vld [vmem:[%s1] sm:$0xff]
    %v17 = vld [vmem:[%s2] sm:$0xff]
    %v18 = vadd.f32 %v15, 0.5
    %20 = vset.pattern.permute.xlu0 0
    %21 = vperm.xlu0 %20, %v16
    %v22 = vpop.permute.xlu0 %21
    %v24 = vmul.f32 %v22, %v18
    %26 = vset.pattern.permute.xlu0 0
    %27 = vperm.xlu0 %26, %v17
    %v28 = vpop.permute.xlu0 %27
    %v30 = vadd.f32 %v24, %v28
    %v31 = vxor.u32 %v30, 2147483648
    %v32 = vmul.f32 %v31, 1.442695
    %v33 = vpow.pop %v32
    %v34 = vadd.f32 %v33, 1.0
    %v35 = vrcp.pop %v34
    %v36 = vmul.f32 1.0, %v35
    %v37 = vsub.f32 %v15, 0.5
    %v38 = vmul.f32 %v22, %v37
    %v39 = vadd.f32 %v38, %v28
    %v40 = vxor.u32 %v39, 2147483648
    %v41 = vmul.f32 %v40, 1.442695
    %v42 = vpow.pop %v41
    %v43 = vadd.f32 %v42, 1.0
    %v44 = vrcp.pop %v43
    %v45 = vmul.f32 1.0, %v44
    %v46 = vsub.f32 %v36, %v45
    %v47 = vmax.f32 %v46, 1e-09
    %v48 = vlog2.pop %v47
    %v49 = vmul.f32 %v48, 0.6931472
    %v50 = vrcp.pop 0.6931472
    %v51 = vmul.f32 %v49, %v50
    %v52 = vsub.f32 0.0, %v51
    %vm53 = vcmask 261120
    %v54 = vsel %vm53, %v52, 0.0
    %55 = vadd.xlane.f32.xlu0 %v54
    %v56 = vpop.xlane.xlu0 %55
    %v57 = vrot.slane %v56, 4
    %v58 = vadd.f32 %v56, %v57
    %v59 = vrot.slane %v58, 2
    %v60 = vadd.f32 %v58, %v59
    %v61 = vrot.slane %v60, 1
    %v62 = vadd.f32 %v60, %v61
    %s63 = vtos %v62
    %v64 = vstv %s63
    %vm65 = vcmask 0
    %66 = vst.msk [vmem:[#allocation2] sm:$0x1] %vm65, %v64
    // Predicated region
    $region14: #{net_forward.8} parent=1 // pred_check
      _
    $region15: #{net_forward.8} parent=1 // pred_check_branch
      %68 = sbr.rel (0) target = $region17
    $region16: #{net_forward.8} parent=1 // pred_region
      %s70 = ssub.s32 16, 16
      %71 = vsyncadd [#allocation3], %s70
      %s73 = sshll.u32 [#allocation2], 4
      %s74 = int_to_ptr.vmem [resolvable:$true] %s73
      %76 = dma.vmem_to_hbm [thread:$0]  %s74, 16, %s3, [#allocation3]
    $region17: #{net_forward.8} parent=1 // pred_fallthru
      _
    // Predicated region
    $region18: #{net_forward.8} parent=1 // pred_check
      _
    $region19: #{net_forward.8} parent=1 // pred_check_branch
      %78 = sbr.rel (0) target = $region21
    $region20: #{net_forward.8} parent=1 // pred_region
      %79 = dma.done [#allocation3], 16
    $region21: #{net_forward.8} parent=1 // pred_fallthru
      _
    %80 = vsyncpa [#allocation3], 1

</llo_original>
